<compile_context>
chip_gen: v6e
topology: v6e:2x2x1
jax: 0.10.0
libtpu: 0.0.40
codegen_flags: <defaults>
</compile_context>

<pallas_src>
import functools

import jax
import jax.numpy as jnp
import numpy as np
from jax.experimental import pallas as pl
from jax.experimental.pallas import tpu as pltpu


def _decoder_kernel(x_ref, xh_ref, w1_ref, b1_ref, wh_ref, wdw_ref, wdh_ref,
                    wdhw_ref, bu_ref, w3_ref, b3_ref, out_ref, hext_ref, *, W, H):
    """One (image, row-block) tile.  TM = TH * W flattened pixels.

    x_ref   : (TM, Cin)     main tile (bf16 or f32)
    xh_ref  : (W,  Cin)     halo = first image row of the next row-block (clamped)
    w1_ref  : (Cin, C4)     b1_ref : (1, C4)        conv1 with BN1 folded in
    wh_ref  : (C4, 4*C4)    taps applied to h          -> phases [00|01|10|11]
    wdw_ref : (C4, 2*C4)    taps applied to h[i, j+1]  -> phases [01|11]
    wdh_ref : (C4, 2*C4)    taps applied to h[i+1, j]  -> phases [10|11]
    wdhw_ref: (C4, C4)      tap  applied to h[i+1,j+1] -> phase  [11]
    bu_ref  : (1, C4)       folded BN2 bias; w3_ref : (C4, Cout); b3_ref : (1, Cout)
    out_ref : (TM, 4*Cout)  phase order [00|01|10|11] along channels (f32)
    hext_ref: (TM+W, C4)    f32 VMEM scratch: h of the tile + h of the halo row
    """
    TM = x_ref.shape[0]
    C4 = w1_ref.shape[1]
    Cout = w3_ref.shape[1]
    cdt = wh_ref.dtype                      # MXU operand dtype (f32 or bf16)
    r = pl.program_id(1)
    f32 = jnp.float32
    relu = lambda v: jnp.maximum(v, 0.0)

    # conv1 (1x1) + folded BN1 + ReLU for the tile and the halo row (f32 epilogue).
    h = relu(jnp.dot(x_ref[...], w1_ref[...], preferred_element_type=f32)
             + b1_ref[...])                                         # (TM, C4) f32
    h_halo = relu(jnp.dot(xh_ref[...], w1_ref[...], preferred_element_type=f32)
                  + b1_ref[...])                                    # (W, C4) f32
    hext_ref[pl.ds(0, TM), :] = h
    hext_ref[pl.ds(TM, W), :] = h_halo

    # Shifted neighbours.  The +1-row shift reads the halo buffer (no cross-tile wrap);
    # the +1-col shift is a single XLU roll whose wrapped element is always the masked
    # last column (W divides TM).
    m = jax.lax.broadcasted_iota(jnp.int32, (TM, 1), 0)
    not_last_col = (m % W) != (W - 1)                 # (i, j+1) stays in the row
    not_last_row = (r * TM + m) < (H - 1) * W         # (i+1, j) stays in the image

    h_dh_raw = hext_ref[pl.ds(W, TM), :]                            # h[i+1, j]
    h_dh = jnp.where(not_last_row, h_dh_raw, 0.0)
    h_dw = jnp.where(not_last_col, pltpu.roll(h, TM - 1, axis=0), 0.0)
    h_dhw = jnp.where(not_last_row & not_last_col,
                      pltpu.roll(h_dh_raw, TM - 1, axis=0), 0.0)    # single roll

    # Transposed conv (k=3, s=2, p=1, op=1) decomposed into the 4 output phases.
    # Only the 9 real taps are multiplied -- no explicit zero blocks on the MXU.
    p_h = jnp.dot(h.astype(cdt), wh_ref[...], preferred_element_type=f32)      # (TM,4C4)
    p_dw = jnp.dot(h_dw.astype(cdt), wdw_ref[...], preferred_element_type=f32) # (TM,2C4)
    p_dh = jnp.dot(h_dh.astype(cdt), wdh_ref[...], preferred_element_type=f32) # (TM,2C4)
    p_dhw = jnp.dot(h_dhw.astype(cdt), wdhw_ref[...], preferred_element_type=f32)

    z00 = p_h[:, 0 * C4:1 * C4]
    z01 = p_h[:, 1 * C4:2 * C4] + p_dw[:, :C4]
    z10 = p_h[:, 2 * C4:3 * C4] + p_dh[:, :C4]
    z11 = p_h[:, 3 * C4:4 * C4] + p_dw[:, C4:] + p_dh[:, C4:] + p_dhw

    bu = bu_ref[...]
    w3 = w3_ref[...]
    b3 = b3_ref[...]
    for ph, z in enumerate((z00, z01, z10, z11)):
        zr = relu(z + bu).astype(cdt)                               # folded BN2 + ReLU
        o = relu(jnp.dot(zr, w3, preferred_element_type=f32) + b3)  # conv3 + BN3 + ReLU
        # Lane-aligned (multiple-of-128 at realistic Cout) per-phase store.
        out_ref[:, ph * Cout:(ph + 1) * Cout] = o.astype(out_ref.dtype)


def _choose_row_block(H, W, Cin, C4, Cout, itemsize, budget_bytes):
    """Largest TH dividing H whose estimated per-step VMEM footprint fits the budget.

    Budget is a conservative scoped-VMEM target so the same choice is safe on v5e
    (16 MiB default scoped), v6e (32 MiB) and v7x (32 MiB scoped / 64 MiB physical).
    """
    weights = (Cin * C4 + 9 * C4 * C4 + C4 * Cout) * itemsize + 6 * C4 * 4
    best = 1
    for th in range(1, H + 1):
        if H % th:
            continue
        tm = th * W
        if (tm % 8) and th != H:          # keep blocks sublane-aligned
            continue
        per_step = (
            2 * tm * Cin * itemsize        # x tile, double buffered
            + 2 * W * Cin * itemsize       # halo row, double buffered
            + 2 * tm * 4 * Cout * 4        # f32 out tile, double buffered
            + (tm + W) * C4 * 4            # f32 h_ext scratch
            + tm * (17 * C4 + 8 * Cout) * 4  # rough live f32 temporaries
        )
        if weights + per_step <= budget_bytes:
            best = th
    return best


def decoder_bottleneck_pallas(x_nhwc, p, *, eps=1e-5, compute_dtype=jnp.float32,
                              vmem_budget_bytes=10 << 20, row_block=None):
    N, H, W, Cin = x_nhwc.shape
    C4 = p["w1"].shape[1]
    Cout = p["w3"].shape[1]
    HW = H * W
    cdt = jnp.dtype(compute_dtype)

    # ---- one-time parameter constant folding (always in f32, outside the kernel) ----
    def bn_fold(g, b, m, v):
        s = g / jnp.sqrt(v + eps)
        return s, b - m * s

    s1, t1 = bn_fold(p["g1"], p["be1"], p["m1"], p["v1"])
    s2, t2 = bn_fold(p["g2"], p["be2"], p["m2"], p["v2"])
    s3, t3 = bn_fold(p["g3"], p["be3"], p["m3"], p["v3"])

    w1f = (p["w1"] * s1).astype(cdt)                 # (Cin, C4)
    b1f = p["b1"] * s1 + t1                          # (1, C4)   f32
    wt = p["wt"] * s2                                # (3,3,C4,C4): BN2 folded into out-ch
    # Phase decomposition of ConvTranspose2d(3, s=2, p=1, op=1): oh = 2*ih - 1 + kh.
    #   out[2i,  2j  ] = h[i,j]@wt[1,1]
    #   out[2i,  2j+1] = h[i,j]@wt[1,2] + h[i,j+1]@wt[1,0]
    #   out[2i+1,2j  ] = h[i,j]@wt[2,1] + h[i+1,j]@wt[0,1]
    #   out[2i+1,2j+1] = h[i,j]@wt[2,2] + h[i,j+1]@wt[2,0] + h[i+1,j]@wt[0,2] + h[i+1,j+1]@wt[0,0]
    wh = jnp.concatenate([wt[1, 1], wt[1, 2], wt[2, 1], wt[2, 2]], axis=1).astype(cdt)
    wdw = jnp.concatenate([wt[1, 0], wt[2, 0]], axis=1).astype(cdt)
    wdh = jnp.concatenate([wt[0, 1], wt[0, 2]], axis=1).astype(cdt)
    wdhw = wt[0, 0].astype(cdt)
    buf = p["bt"] * s2 + t2                          # (1, C4)   f32
    w3f = (p["w3"] * s3).astype(cdt)                 # (C4, Cout)
    b3f = p["b3"] * s3 + t3                          # (1, Cout) f32

    if row_block is None:
        TH = _choose_row_block(H, W, Cin, C4, Cout, cdt.itemsize, vmem_budget_bytes)
    else:
        assert H % row_block == 0
        TH = row_block
    TM = TH * W
    R = H // TH

    xf = x_nhwc.astype(cdt).reshape(N, HW, Cin)      # cast once -> halves x DMA in bf16

    # Weights / biases: whole-array, single-buffered VMEM residents (no per-step DMA).
    wspec = pl.BlockSpec(memory_space=pltpu.MemorySpace.VMEM)

    out = pl.pallas_call(
        functools.partial(_decoder_kernel, W=W, H=H),
        out_shape=jax.ShapeDtypeStruct((N, HW, 4 * Cout), jnp.float32),
        grid=(N, R),
        in_specs=[
            pl.BlockSpec((None, TM, Cin), lambda n, r: (n, r, 0)),     # main x tile
            pl.BlockSpec((None, W, Cin),                                # 1-row halo
                         lambda n, r: (n, jnp.minimum((r + 1) * TH, H - 1), 0)),
            wspec, wspec,                          # w1, b1
            wspec, wspec, wspec, wspec, wspec,     # wh, wdw, wdh, wdhw, bu
            wspec, wspec,                          # w3, b3
        ],
        out_specs=pl.BlockSpec((None, TM, 4 * Cout), lambda n, r: (n, r, 0)),
        scratch_shapes=[pltpu.VMEM((TM + W, C4), jnp.float32)],
        compiler_params=pltpu.CompilerParams(
            dimension_semantics=("parallel", "parallel")),   # v7x: 2 TCs split the grid
    )(xf, xf, w1f, b1f, wh, wdw, wdh, wdhw, buf, w3f, b3f)

    # (N, H*W, [ph, pw, Cout]) -> (N, 2H, 2W, Cout): interleave phases (wrapper glue).
    out = out.reshape(N, H, W, 2, 2, Cout).transpose(0, 1, 3, 2, 4, 5)
    return out.reshape(N, 2 * H, 2 * W, Cout)


def decoder_bottleneck_ref(x_nhwc, p):
    """Pure NumPy reference (direct transposed-conv loops, unfused BN)."""
    eps = 1e-5
    x = np.asarray(x_nhwc, np.float32)
    pn = {k: np.asarray(v, np.float32) for k, v in p.items()}

    def bn(y, g, b, m, v):
        return (y - m) / np.sqrt(v + eps) * g + b

    N, H, W, Cin = x.shape
    C4 = pn["w1"].shape[1]
    h = x.reshape(-1, Cin) @ pn["w1"] + pn["b1"]
    h = np.maximum(bn(h, pn["g1"], pn["be1"], pn["m1"], pn["v1"]), 0.0)
    h = h.reshape(N, H, W, C4)

    Ho, Wo = 2 * H, 2 * W
    y = np.zeros((N, Ho, Wo, C4), np.float32)
    wt = pn["wt"]  # (kh, kw, ci, co)
    for kh in range(3):
        for kw in range(3):
            for ih in range(H):
                oh = 2 * ih - 1 + kh
                if oh < 0 or oh >= Ho:
                    continue
                for iw in range(W):
                    ow = 2 * iw - 1 + kw
                    if ow < 0 or ow >= Wo:
                        continue
                    y[:, oh, ow, :] += h[:, ih, iw, :] @ wt[kh, kw]
    y = y + pn["bt"]
    y = np.maximum(bn(y, pn["g2"], pn["be2"], pn["m2"], pn["v2"]), 0.0)

    Cout = pn["w3"].shape[1]
    o = y.reshape(-1, C4) @ pn["w3"] + pn["b3"]
    o = np.maximum(bn(o, pn["g3"], pn["be3"], pn["m3"], pn["v3"]), 0.0)
    return o.reshape(N, Ho, Wo, Cout)


def make_params(key, in_channels, n_filters):
    C4 = in_channels // 4
    ks = jax.random.split(key, 24)
    nrm = lambda k, s: 0.1 * jax.random.normal(k, s, jnp.float32)

    def bn_params(k0, k1, k2, k3, c):
        return (1.0 + 0.1 * jax.random.normal(k0, (1, c), jnp.float32),     # gamma
                0.1 * jax.random.normal(k1, (1, c), jnp.float32),           # beta
                0.1 * jax.random.normal(k2, (1, c), jnp.float32),           # running mean
                0.5 + jnp.abs(jax.random.normal(k3, (1, c), jnp.float32)))  # running var

    g1, be1, m1, v1 = bn_params(ks[2], ks[3], ks[4], ks[5], C4)
    g2, be2, m2, v2 = bn_params(ks[9], ks[10], ks[11], ks[12], C4)
    g3, be3, m3, v3 = bn_params(ks[15], ks[16], ks[17], ks[18], n_filters)

    return dict(
        # conv1: PyTorch weight (C4, Cin, 1, 1) stored here as (Cin, C4)
        w1=nrm(ks[0], (in_channels, C4)), b1=nrm(ks[1], (1, C4)),
        g1=g1, be1=be1, m1=m1, v1=v1,
        # ConvTranspose2d weight: PyTorch (Cin=C4, Cout=C4, 3, 3) stored as (3, 3, Cin, Cout)
        wt=nrm(ks[6], (3, 3, C4, C4)), bt=nrm(ks[7], (1, C4)),
        g2=g2, be2=be2, m2=m2, v2=v2,
        # conv3: PyTorch weight (Cout, C4, 1, 1) stored as (C4, Cout)
        w3=nrm(ks[13], (C4, n_filters)), b3=nrm(ks[14], (1, n_filters)),
        g3=g3, be3=be3, m3=m3, v3=v3,
    )


if __name__ == "__main__":
    N, in_channels, n_filters, H, W = 2, 16, 8, 8, 8

    key = jax.random.PRNGKey(0)
    kx, kp = jax.random.split(key)
    # NHWC input (equivalent to PyTorch NCHW input of shape (2, 16, 8, 8))
    x = jax.random.normal(kx, (N, H, W, in_channels), jnp.float32)
    params = make_params(kp, in_channels, n_filters)

    ref = decoder_bottleneck_ref(x, params)

    # f32 path, auto-chosen tile (single row-block at these demo shapes).
    out = jax.block_until_ready(decoder_bottleneck_pallas(x, params))
    assert out.shape == (N, 2 * H, 2 * W, n_filters), out.shape
    np.testing.assert_allclose(np.asarray(out), ref, rtol=1e-4, atol=1e-4)

    # f32 path with a forced 2-row tile: exercises the grid + halo (cross-tile shifts).
    out_tiled = jax.block_until_ready(
        decoder_bottleneck_pallas(x, params, row_block=2))
    np.testing.assert_allclose(np.asarray(out_tiled), ref, rtol=1e-4, atol=1e-4)

    # bf16 MXU-operand path (f32 accumulation / epilogue); looser tolerance.
    out_bf16 = jax.block_until_ready(
        decoder_bottleneck_pallas(x, params, compute_dtype=jnp.bfloat16))
    np.testing.assert_allclose(np.asarray(out_bf16), ref, rtol=5e-2, atol=5e-2)

    print("KERNEL_OK")
</pallas_src>

<mosaic_0001>
module attributes {stable_mosaic.version = 11 : i64} {
  func.func @_decoder_kernel(%arg0: i32, %arg1: i32, %arg2: memref<1x64x16xf32, #tpu.memory_space<vmem>>, %arg3: memref<1x8x16xf32, #tpu.memory_space<vmem>>, %arg4: memref<16x4xf32, #tpu.memory_space<vmem>>, %arg5: memref<1x4xf32, #tpu.memory_space<vmem>>, %arg6: memref<4x16xf32, #tpu.memory_space<vmem>>, %arg7: memref<4x8xf32, #tpu.memory_space<vmem>>, %arg8: memref<4x8xf32, #tpu.memory_space<vmem>>, %arg9: memref<4x4xf32, #tpu.memory_space<vmem>>, %arg10: memref<1x4xf32, #tpu.memory_space<vmem>>, %arg11: memref<4x8xf32, #tpu.memory_space<vmem>>, %arg12: memref<1x8xf32, #tpu.memory_space<vmem>>, %arg13: memref<1x64x32xf32, #tpu.memory_space<vmem>>, %arg14: memref<72x4xf32, #tpu.memory_space<vmem>>) attributes {dimension_semantics = [#tpu.dimension_semantics<parallel>, #tpu.dimension_semantics<parallel>], iteration_bounds = array<i64: 2, 1>, scalar_prefetch = 0 : i64, scratch_operands = 1 : i64, tpu.core_type = #tpu.core_type<tc>, window_params = [{transform_indices = @transform_0, window_bounds = array<i64: 1, 64, 16>}, {transform_indices = @transform_1, window_bounds = array<i64: 1, 8, 16>}, {pipeline_mode = #tpu.pipeline_mode<synchronous>, transform_indices = @transform_2, window_bounds = array<i64: 16, 4>}, {pipeline_mode = #tpu.pipeline_mode<synchronous>, transform_indices = @transform_3, window_bounds = array<i64: 1, 4>}, {pipeline_mode = #tpu.pipeline_mode<synchronous>, transform_indices = @transform_4, window_bounds = array<i64: 4, 16>}, {pipeline_mode = #tpu.pipeline_mode<synchronous>, transform_indices = @transform_5, window_bounds = array<i64: 4, 8>}, {pipeline_mode = #tpu.pipeline_mode<synchronous>, transform_indices = @transform_6, window_bounds = array<i64: 4, 8>}, {pipeline_mode = #tpu.pipeline_mode<synchronous>, transform_indices = @transform_7, window_bounds = array<i64: 4, 4>}, {pipeline_mode = #tpu.pipeline_mode<synchronous>, transform_indices = @transform_8, window_bounds = array<i64: 1, 4>}, {pipeline_mode = #tpu.pipeline_mode<synchronous>, transform_indices = @transform_9, window_bounds = array<i64: 4, 8>}, {pipeline_mode = #tpu.pipeline_mode<synchronous>, transform_indices = @transform_10, window_bounds = array<i64: 1, 8>}, {transform_indices = @transform_11, window_bounds = array<i64: 1, 64, 32>}]} {
    %c0 = arith.constant 0 : index
    %c0_0 = arith.constant 0 : index
    %c0_1 = arith.constant 0 : index
    %0 = vector.load %arg2[%c0, %c0_0, %c0_1] : memref<1x64x16xf32, #tpu.memory_space<vmem>>, vector<1x64x16xf32>
    %1 = vector.shape_cast %0 : vector<1x64x16xf32> to vector<64x16xf32>
    %c0_2 = arith.constant 0 : index
    %c0_3 = arith.constant 0 : index
    %2 = vector.load %arg4[%c0_2, %c0_3] : memref<16x4xf32, #tpu.memory_space<vmem>>, vector<16x4xf32>
    %cst = arith.constant dense<0.000000e+00> : vector<64x4xf32>
    %3 = tpu.matmul %1, %2, %cst {dimension_numbers = #tpu.dot_dimension_numbers<[1], [0], [0], [1], [0, 0, 1, 1], [], []>} : vector<64x16xf32>, vector<16x4xf32>, vector<64x4xf32> -> vector<64x4xf32>
    %c0_4 = arith.constant 0 : index
    %c0_5 = arith.constant 0 : index
    %4 = vector.load %arg5[%c0_4, %c0_5] : memref<1x4xf32, #tpu.memory_space<vmem>>, vector<1x4xf32>
    %5 = vector.broadcast %4 : vector<1x4xf32> to vector<64x4xf32>
    %6 = arith.addf %3, %5 : vector<64x4xf32>
    %cst_6 = arith.constant 0.000000e+00 : f32
    %7 = vector.broadcast %cst_6 : f32 to vector<64x4xf32>
    %8 = arith.maximumf %6, %7 : vector<64x4xf32>
    %c0_7 = arith.constant 0 : index
    %c0_8 = arith.constant 0 : index
    %c0_9 = arith.constant 0 : index
    %9 = vector.load %arg3[%c0_7, %c0_8, %c0_9] : memref<1x8x16xf32, #tpu.memory_space<vmem>>, vector<1x8x16xf32>
    %10 = vector.shape_cast %9 : vector<1x8x16xf32> to vector<8x16xf32>
    %c0_10 = arith.constant 0 : index
    %c0_11 = arith.constant 0 : index
    %11 = vector.load %arg4[%c0_10, %c0_11] : memref<16x4xf32, #tpu.memory_space<vmem>>, vector<16x4xf32>
    %cst_12 = arith.constant dense<0.000000e+00> : vector<8x4xf32>
    %12 = tpu.matmul %10, %11, %cst_12 {dimension_numbers = #tpu.dot_dimension_numbers<[1], [0], [0], [1], [0, 0, 1, 1], [], []>} : vector<8x16xf32>, vector<16x4xf32>, vector<8x4xf32> -> vector<8x4xf32>
    %c0_13 = arith.constant 0 : index
    %c0_14 = arith.constant 0 : index
    %13 = vector.load %arg5[%c0_13, %c0_14] : memref<1x4xf32, #tpu.memory_space<vmem>>, vector<1x4xf32>
    %14 = vector.broadcast %13 : vector<1x4xf32> to vector<8x4xf32>
    %15 = arith.addf %12, %14 : vector<8x4xf32>
    %cst_15 = arith.constant 0.000000e+00 : f32
    %16 = vector.broadcast %cst_15 : f32 to vector<8x4xf32>
    %17 = arith.maximumf %15, %16 : vector<8x4xf32>
    %c0_16 = arith.constant 0 : index
    %c0_17 = arith.constant 0 : index
    %18 = vector.load %arg14[%c0_16, %c0_17] : memref<72x4xf32, #tpu.memory_space<vmem>>, vector<64x4xf32>
    tpu.vector_store %arg14[%c0_16, %c0_17], %8 {strides = array<i32>} : memref<72x4xf32, #tpu.memory_space<vmem>>, vector<64x4xf32>,
    %c64 = arith.constant 64 : index
    %c0_18 = arith.constant 0 : index
    %19 = vector.load %arg14[%c64, %c0_18] : memref<72x4xf32, #tpu.memory_space<vmem>>, vector<8x4xf32>
    tpu.vector_store %arg14[%c64, %c0_18], %17 {strides = array<i32>} : memref<72x4xf32, #tpu.memory_space<vmem>>, vector<8x4xf32>,
    %20 = tpu.iota {dimensions = array<i32: 0>} : vector<64x1xi32>
    %c8_i32 = arith.constant 8 : i32
    %c0_i32 = arith.constant 0 : i32
    %21 = arith.cmpi eq, %c8_i32, %c0_i32 : i32
    %c1_i32 = arith.constant 1 : i32
    %22 = arith.select %21, %c1_i32, %c8_i32 : i32
    %23 = vector.broadcast %22 : i32 to vector<64x1xi32>
    %24 = arith.remsi %20, %23 : vector<64x1xi32>
    %c0_i32_19 = arith.constant 0 : i32
    %25 = vector.broadcast %c0_i32_19 : i32 to vector<64x1xi32>
    %26 = arith.cmpi ne, %24, %25 : vector<64x1xi32>
    %c0_i32_20 = arith.constant 0 : i32
    %27 = vector.broadcast %c0_i32_20 : i32 to vector<64x1xi32>
    %28 = arith.cmpi slt, %24, %27 : vector<64x1xi32>
    %c0_i32_21 = arith.constant 0 : i32
    %29 = arith.cmpi slt, %22, %c0_i32_21 : i32
    %30 = vector.broadcast %29 : i1 to vector<64x1xi1>
    %31 = vector.broadcast %30 : vector<64x1xi1> to vector<64x1xi1>
    %32 = arith.xori %28, %31 : vector<64x1xi1>
    %33 = arith.andi %32, %26 : vector<64x1xi1>
    %34 = vector.broadcast %22 : i32 to vector<64x1xi32>
    %35 = arith.addi %24, %34 : vector<64x1xi32>
    %36 = arith.select %33, %35, %24 : vector<64x1xi1>, vector<64x1xi32>
    %c7_i32 = arith.constant 7 : i32
    %37 = vector.broadcast %c7_i32 : i32 to vector<64x1xi32>
    %38 = arith.cmpi ne, %36, %37 : vector<64x1xi32>
    %c64_i32 = arith.constant 64 : i32
    %39 = arith.muli %arg1, %c64_i32 : i32
    %40 = vector.broadcast %39 : i32 to vector<64x1xi32>
    %41 = arith.addi %40, %20 : vector<64x1xi32>
    %c56_i32 = arith.constant 56 : i32
    %42 = vector.broadcast %c56_i32 : i32 to vector<64x1xi32>
    %43 = arith.cmpi slt, %41, %42 : vector<64x1xi32>
    %c8 = arith.constant 8 : index
    %c0_22 = arith.constant 0 : index
    %44 = vector.load %arg14[%c8, %c0_22] : memref<72x4xf32, #tpu.memory_space<vmem>>, vector<64x4xf32>
    %cst_23 = arith.constant 0.000000e+00 : f32
    %45 = vector.shape_cast %43 : vector<64x1xi1> to vector<64x1xi1>
    %46 = vector.broadcast %45 : vector<64x1xi1> to vector<64x4xi1>
    %47 = vector.broadcast %cst_23 : f32 to vector<64x4xf32>
    %48 = arith.select %46, %44, %47 : vector<64x4xi1>, vector<64x4xf32>
    %c63_i32 = arith.constant 63 : i32
    %49 = tpu.dynamic_rotate %8 by %c63_i32 dim 0 : vector<64x4xf32>, i32 -> vector<64x4xf32>
    %cst_24 = arith.constant 0.000000e+00 : f32
    %50 = vector.shape_cast %38 : vector<64x1xi1> to vector<64x1xi1>
    %51 = vector.broadcast %50 : vector<64x1xi1> to vector<64x4xi1>
    %52 = vector.broadcast %cst_24 : f32 to vector<64x4xf32>
    %53 = arith.select %51, %49, %52 : vector<64x4xi1>, vector<64x4xf32>
    %54 = arith.andi %43, %38 : vector<64x1xi1>
    %c63_i32_25 = arith.constant 63 : i32
    %55 = tpu.dynamic_rotate %44 by %c63_i32_25 dim 0 : vector<64x4xf32>, i32 -> vector<64x4xf32>
    %cst_26 = arith.constant 0.000000e+00 : f32
    %56 = vector.shape_cast %54 : vector<64x1xi1> to vector<64x1xi1>
    %57 = vector.broadcast %56 : vector<64x1xi1> to vector<64x4xi1>
    %58 = vector.broadcast %cst_26 : f32 to vector<64x4xf32>
    %59 = arith.select %57, %55, %58 : vector<64x4xi1>, vector<64x4xf32>
    %c0_27 = arith.constant 0 : index
    %c0_28 = arith.constant 0 : index
    %60 = vector.load %arg6[%c0_27, %c0_28] : memref<4x16xf32, #tpu.memory_space<vmem>>, vector<4x16xf32>
    %cst_29 = arith.constant dense<0.000000e+00> : vector<64x16xf32>
    %61 = tpu.matmul %8, %60, %cst_29 {dimension_numbers = #tpu.dot_dimension_numbers<[1], [0], [0], [1], [0, 0, 1, 1], [], []>} : vector<64x4xf32>, vector<4x16xf32>, vector<64x16xf32> -> vector<64x16xf32>
    %c0_30 = arith.constant 0 : index
    %c0_31 = arith.constant 0 : index
    %62 = vector.load %arg7[%c0_30, %c0_31] : memref<4x8xf32, #tpu.memory_space<vmem>>, vector<4x8xf32>
    %cst_32 = arith.constant dense<0.000000e+00> : vector<64x8xf32>
    %63 = tpu.matmul %53, %62, %cst_32 {dimension_numbers = #tpu.dot_dimension_numbers<[1], [0], [0], [1], [0, 0, 1, 1], [], []>} : vector<64x4xf32>, vector<4x8xf32>, vector<64x8xf32> -> vector<64x8xf32>
    %c0_33 = arith.constant 0 : index
    %c0_34 = arith.constant 0 : index
    %64 = vector.load %arg8[%c0_33, %c0_34] : memref<4x8xf32, #tpu.memory_space<vmem>>, vector<4x8xf32>
    %cst_35 = arith.constant dense<0.000000e+00> : vector<64x8xf32>
    %65 = tpu.matmul %48, %64, %cst_35 {dimension_numbers = #tpu.dot_dimension_numbers<[1], [0], [0], [1], [0, 0, 1, 1], [], []>} : vector<64x4xf32>, vector<4x8xf32>, vector<64x8xf32> -> vector<64x8xf32>
    %c0_36 = arith.constant 0 : index
    %c0_37 = arith.constant 0 : index
    %66 = vector.load %arg9[%c0_36, %c0_37] : memref<4x4xf32, #tpu.memory_space<vmem>>, vector<4x4xf32>
    %cst_38 = arith.constant dense<0.000000e+00> : vector<64x4xf32>
    %67 = tpu.matmul %59, %66, %cst_38 {dimension_numbers = #tpu.dot_dimension_numbers<[1], [0], [0], [1], [0, 0, 1, 1], [], []>} : vector<64x4xf32>, vector<4x4xf32>, vector<64x4xf32> -> vector<64x4xf32>
    %68 = vector.extract_strided_slice %61 {offsets = [0, 0], sizes = [64, 4], strides = [1, 1]} : vector<64x16xf32> to vector<64x4xf32>
    %69 = vector.extract_strided_slice %61 {offsets = [0, 4], sizes = [64, 4], strides = [1, 1]} : vector<64x16xf32> to vector<64x4xf32>
    %70 = vector.extract_strided_slice %63 {offsets = [0, 0], sizes = [64, 4], strides = [1, 1]} : vector<64x8xf32> to vector<64x4xf32>
    %71 = arith.addf %69, %70 : vector<64x4xf32>
    %72 = vector.extract_strided_slice %61 {offsets = [0, 8], sizes = [64, 4], strides = [1, 1]} : vector<64x16xf32> to vector<64x4xf32>
    %73 = vector.extract_strided_slice %65 {offsets = [0, 0], sizes = [64, 4], strides = [1, 1]} : vector<64x8xf32> to vector<64x4xf32>
    %74 = arith.addf %72, %73 : vector<64x4xf32>
    %75 = vector.extract_strided_slice %61 {offsets = [0, 12], sizes = [64, 4], strides = [1, 1]} : vector<64x16xf32> to vector<64x4xf32>
    %76 = vector.extract_strided_slice %63 {offsets = [0, 4], sizes = [64, 4], strides = [1, 1]} : vector<64x8xf32> to vector<64x4xf32>
    %77 = arith.addf %75, %76 : vector<64x4xf32>
    %78 = vector.extract_strided_slice %65 {offsets = [0, 4], sizes = [64, 4], strides = [1, 1]} : vector<64x8xf32> to vector<64x4xf32>
    %79 = arith.addf %77, %78 : vector<64x4xf32>
    %80 = arith.addf %79, %67 : vector<64x4xf32>
    %c0_39 = arith.constant 0 : index
    %c0_40 = arith.constant 0 : index
    %81 = vector.load %arg10[%c0_39, %c0_40] : memref<1x4xf32, #tpu.memory_space<vmem>>, vector<1x4xf32>
    %c0_41 = arith.constant 0 : index
    %c0_42 = arith.constant 0 : index
    %82 = vector.load %arg11[%c0_41, %c0_42] : memref<4x8xf32, #tpu.memory_space<vmem>>, vector<4x8xf32>
    %c0_43 = arith.constant 0 : index
    %c0_44 = arith.constant 0 : index
    %83 = vector.load %arg12[%c0_43, %c0_44] : memref<1x8xf32, #tpu.memory_space<vmem>>, vector<1x8xf32>
    %84 = vector.broadcast %81 : vector<1x4xf32> to vector<64x4xf32>
    %85 = arith.addf %68, %84 : vector<64x4xf32>
    %cst_45 = arith.constant 0.000000e+00 : f32
    %86 = vector.broadcast %cst_45 : f32 to vector<64x4xf32>
    %87 = arith.maximumf %85, %86 : vector<64x4xf32>
    %cst_46 = arith.constant dense<0.000000e+00> : vector<64x8xf32>
    %88 = tpu.matmul %87, %82, %cst_46 {dimension_numbers = #tpu.dot_dimension_numbers<[1], [0], [0], [1], [0, 0, 1, 1], [], []>} : vector<64x4xf32>, vector<4x8xf32>, vector<64x8xf32> -> vector<64x8xf32>
    %89 = vector.broadcast %83 : vector<1x8xf32> to vector<64x8xf32>
    %90 = arith.addf %88, %89 : vector<64x8xf32>
    %cst_47 = arith.constant 0.000000e+00 : f32
    %91 = vector.broadcast %cst_47 : f32 to vector<64x8xf32>
    %92 = arith.maximumf %90, %91 : vector<64x8xf32>
    %c0_48 = arith.constant 0 : index
    %c0_49 = arith.constant 0 : index
    %c0_50 = arith.constant 0 : index
    %93 = vector.load %arg13[%c0_48, %c0_49, %c0_50] : memref<1x64x32xf32, #tpu.memory_space<vmem>>, vector<1x64x8xf32>
    %94 = vector.shape_cast %93 : vector<1x64x8xf32> to vector<64x8xf32>
    %95 = vector.shape_cast %92 : vector<64x8xf32> to vector<1x64x8xf32>
    tpu.vector_store %arg13[%c0_48, %c0_49, %c0_50], %95 {strides = array<i32>} : memref<1x64x32xf32, #tpu.memory_space<vmem>>, vector<1x64x8xf32>,
    %96 = vector.broadcast %81 : vector<1x4xf32> to vector<64x4xf32>
    %97 = arith.addf %71, %96 : vector<64x4xf32>
    %cst_51 = arith.constant 0.000000e+00 : f32
    %98 = vector.broadcast %cst_51 : f32 to vector<64x4xf32>
    %99 = arith.maximumf %97, %98 : vector<64x4xf32>
    %cst_52 = arith.constant dense<0.000000e+00> : vector<64x8xf32>
    %100 = tpu.matmul %99, %82, %cst_52 {dimension_numbers = #tpu.dot_dimension_numbers<[1], [0], [0], [1], [0, 0, 1, 1], [], []>} : vector<64x4xf32>, vector<4x8xf32>, vector<64x8xf32> -> vector<64x8xf32>
    %101 = vector.broadcast %83 : vector<1x8xf32> to vector<64x8xf32>
    %102 = arith.addf %100, %101 : vector<64x8xf32>
    %cst_53 = arith.constant 0.000000e+00 : f32
    %103 = vector.broadcast %cst_53 : f32 to vector<64x8xf32>
    %104 = arith.maximumf %102, %103 : vector<64x8xf32>
    %c0_54 = arith.constant 0 : index
    %c0_55 = arith.constant 0 : index
    %c8_56 = arith.constant 8 : index
    %105 = vector.load %arg13[%c0_54, %c0_55, %c8_56] : memref<1x64x32xf32, #tpu.memory_space<vmem>>, vector<1x64x8xf32>
    %106 = vector.shape_cast %105 : vector<1x64x8xf32> to vector<64x8xf32>
    %107 = vector.shape_cast %104 : vector<64x8xf32> to vector<1x64x8xf32>
    tpu.vector_store %arg13[%c0_54, %c0_55, %c8_56], %107 {strides = array<i32>} : memref<1x64x32xf32, #tpu.memory_space<vmem>>, vector<1x64x8xf32>,
    %108 = vector.broadcast %81 : vector<1x4xf32> to vector<64x4xf32>
    %109 = arith.addf %74, %108 : vector<64x4xf32>
    %cst_57 = arith.constant 0.000000e+00 : f32
    %110 = vector.broadcast %cst_57 : f32 to vector<64x4xf32>
    %111 = arith.maximumf %109, %110 : vector<64x4xf32>
    %cst_58 = arith.constant dense<0.000000e+00> : vector<64x8xf32>
    %112 = tpu.matmul %111, %82, %cst_58 {dimension_numbers = #tpu.dot_dimension_numbers<[1], [0], [0], [1], [0, 0, 1, 1], [], []>} : vector<64x4xf32>, vector<4x8xf32>, vector<64x8xf32> -> vector<64x8xf32>
    %113 = vector.broadcast %83 : vector<1x8xf32> to vector<64x8xf32>
    %114 = arith.addf %112, %113 : vector<64x8xf32>
    %cst_59 = arith.constant 0.000000e+00 : f32
    %115 = vector.broadcast %cst_59 : f32 to vector<64x8xf32>
    %116 = arith.maximumf %114, %115 : vector<64x8xf32>
    %c0_60 = arith.constant 0 : index
    %c0_61 = arith.constant 0 : index
    %c16 = arith.constant 16 : index
    %117 = vector.load %arg13[%c0_60, %c0_61, %c16] : memref<1x64x32xf32, #tpu.memory_space<vmem>>, vector<1x64x8xf32>
    %118 = vector.shape_cast %117 : vector<1x64x8xf32> to vector<64x8xf32>
    %119 = vector.shape_cast %116 : vector<64x8xf32> to vector<1x64x8xf32>
    tpu.vector_store %arg13[%c0_60, %c0_61, %c16], %119 {strides = array<i32>} : memref<1x64x32xf32, #tpu.memory_space<vmem>>, vector<1x64x8xf32>,
    %120 = vector.broadcast %81 : vector<1x4xf32> to vector<64x4xf32>
    %121 = arith.addf %80, %120 : vector<64x4xf32>
    %cst_62 = arith.constant 0.000000e+00 : f32
    %122 = vector.broadcast %cst_62 : f32 to vector<64x4xf32>
    %123 = arith.maximumf %121, %122 : vector<64x4xf32>
    %cst_63 = arith.constant dense<0.000000e+00> : vector<64x8xf32>
    %124 = tpu.matmul %123, %82, %cst_63 {dimension_numbers = #tpu.dot_dimension_numbers<[1], [0], [0], [1], [0, 0, 1, 1], [], []>} : vector<64x4xf32>, vector<4x8xf32>, vector<64x8xf32> -> vector<64x8xf32>
    %125 = vector.broadcast %83 : vector<1x8xf32> to vector<64x8xf32>
    %126 = arith.addf %124, %125 : vector<64x8xf32>
    %cst_64 = arith.constant 0.000000e+00 : f32
    %127 = vector.broadcast %cst_64 : f32 to vector<64x8xf32>
    %128 = arith.maximumf %126, %127 : vector<64x8xf32>
    %c0_65 = arith.constant 0 : index
    %c0_66 = arith.constant 0 : index
    %c24 = arith.constant 24 : index
    %129 = vector.load %arg13[%c0_65, %c0_66, %c24] : memref<1x64x32xf32, #tpu.memory_space<vmem>>, vector<1x64x8xf32>
    %130 = vector.shape_cast %129 : vector<1x64x8xf32> to vector<64x8xf32>
    %131 = vector.shape_cast %128 : vector<64x8xf32> to vector<1x64x8xf32>
    tpu.vector_store %arg13[%c0_65, %c0_66, %c24], %131 {strides = array<i32>} : memref<1x64x32xf32, #tpu.memory_space<vmem>>, vector<1x64x8xf32>,
    return
  }
  func.func @transform_0(%arg0: i32, %arg1: i32) -> (i32, i32, i32) {
    %c0_i32 = arith.constant 0 : i32
    %c0_i32_0 = arith.constant 0 : i32
    return %arg0, %arg1, %c0_i32 : i32, i32, i32
  }
  func.func @transform_1(%arg0: i32, %arg1: i32) -> (i32, i32, i32) {
    %c1_i32 = arith.constant 1 : i32
    %0 = arith.addi %arg1, %c1_i32 : i32
    %c8_i32 = arith.constant 8 : i32
    %1 = arith.muli %0, %c8_i32 : i32
    %c7_i32 = arith.constant 7 : i32
    %2 = arith.minsi %1, %c7_i32 : i32
    %c0_i32 = arith.constant 0 : i32
    %c0_i32_0 = arith.constant 0 : i32
    return %arg0, %2, %c0_i32 : i32, i32, i32
  }
  func.func @transform_2(%arg0: i32, %arg1: i32) -> (i32, i32) {
    %c0_i32 = arith.constant 0 : i32
    %c0_i32_0 = arith.constant 0 : i32
    %c0_i32_1 = arith.constant 0 : i32
    return %c0_i32, %c0_i32_0 : i32, i32
  }
  func.func @transform_3(%arg0: i32, %arg1: i32) -> (i32, i32) {
    %c0_i32 = arith.constant 0 : i32
    %c0_i32_0 = arith.constant 0 : i32
    %c0_i32_1 = arith.constant 0 : i32
    return %c0_i32, %c0_i32_0 : i32, i32
  }
  func.func @transform_4(%arg0: i32, %arg1: i32) -> (i32, i32) {
    %c0_i32 = arith.constant 0 : i32
    %c0_i32_0 = arith.constant 0 : i32
    %c0_i32_1 = arith.constant 0 : i32
    return %c0_i32, %c0_i32_0 : i32, i32
  }
  func.func @transform_5(%arg0: i32, %arg1: i32) -> (i32, i32) {
    %c0_i32 = arith.constant 0 : i32
    %c0_i32_0 = arith.constant 0 : i32
    %c0_i32_1 = arith.constant 0 : i32
    return %c0_i32, %c0_i32_0 : i32, i32
  }
  func.func @transform_6(%arg0: i32, %arg1: i32) -> (i32, i32) {
    %c0_i32 = arith.constant 0 : i32
    %c0_i32_0 = arith.constant 0 : i32
    %c0_i32_1 = arith.constant 0 : i32
    return %c0_i32, %c0_i32_0 : i32, i32
  }
  func.func @transform_7(%arg0: i32, %arg1: i32) -> (i32, i32) {
    %c0_i32 = arith.constant 0 : i32
    %c0_i32_0 = arith.constant 0 : i32
    %c0_i32_1 = arith.constant 0 : i32
    return %c0_i32, %c0_i32_0 : i32, i32
  }
  func.func @transform_8(%arg0: i32, %arg1: i32) -> (i32, i32) {
    %c0_i32 = arith.constant 0 : i32
    %c0_i32_0 = arith.constant 0 : i32
    %c0_i32_1 = arith.constant 0 : i32
    return %c0_i32, %c0_i32_0 : i32, i32
  }
  func.func @transform_9(%arg0: i32, %arg1: i32) -> (i32, i32) {
    %c0_i32 = arith.constant 0 : i32
    %c0_i32_0 = arith.constant 0 : i32
    %c0_i32_1 = arith.constant 0 : i32
    return %c0_i32, %c0_i32_0 : i32, i32
  }
  func.func @transform_10(%arg0: i32, %arg1: i32) -> (i32, i32) {
    %c0_i32 = arith.constant 0 : i32
    %c0_i32_0 = arith.constant 0 : i32
    %c0_i32_1 = arith.constant 0 : i32
    return %c0_i32, %c0_i32_0 : i32, i32
  }
  func.func @transform_11(%arg0: i32, %arg1: i32) -> (i32, i32, i32) {
    %c0_i32 = arith.constant 0 : i32
    %c0_i32_0 = arith.constant 0 : i32
    return %arg0, %arg1, %c0_i32 : i32, i32, i32
  }
}

</mosaic_0001>

<llo_original>
// kernel: tpu_custom_call.1
$region0: #{tpu_custom_call.1}
  #allocation0 [shape = 'u32[]', space=smem, size = 0x4, offset = 0x4, fixed_abs, tag = 'smem constant byte address 0x4 - core index']
  #allocation1 [shape = 'u32[144,128]{1,0:T(1,128)}', space=vmem, size = 0x12000, scoped, tag = 'internal scratch']
  #allocation2 [shape = 'f32[72,4]{1,0:T(8,128)}', space=vmem, size = 0x9000, scoped, tag = 'scratch operand']
  %s0 = inlined_call_operand.vmem [shape: f32[2,64,16], index: 0, kind: input, shape index: {}]
  %s1 = inlined_call_operand.vmem [shape: f32[2,64,16], index: 1, kind: input, shape index: {}]
  %s2 = inlined_call_operand.vmem [shape: f32[16,4], index: 2, kind: input, shape index: {}]
  %s3 = inlined_call_operand.vmem [shape: f32[1,4], index: 3, kind: input, shape index: {}]
  %s4 = inlined_call_operand.vmem [shape: f32[4,16], index: 4, kind: input, shape index: {}]
  %s5 = inlined_call_operand.vmem [shape: f32[4,8], index: 5, kind: input, shape index: {}]
  %s6 = inlined_call_operand.vmem [shape: f32[4,8], index: 6, kind: input, shape index: {}]
  %s7 = inlined_call_operand.vmem [shape: f32[4,4], index: 7, kind: input, shape index: {}]
  %s8 = inlined_call_operand.vmem [shape: f32[1,4], index: 8, kind: input, shape index: {}]
  %s9 = inlined_call_operand.vmem [shape: f32[4,8], index: 9, kind: input, shape index: {}]
  %s10 = inlined_call_operand.vmem [shape: f32[1,8], index: 10, kind: input, shape index: {}]
  %s11 = inlined_call_operand.vmem [shape: f32[2,64,32], index: 11, kind: output, shape index: {}]
  %s12 = sld [smem:[#allocation0]]
  $region77: #{tpu_custom_call.1} parent=0
    _
  %s14 = ssub.s32 1, %s12
  %s15 = scalar_select 0, %s14, %s12
  loop: start=0, step=1, limit=4
  $region2: #{tpu_custom_call.1} parent=0 // loop_pre_header
    _
  $region3: #{tpu_custom_call.1} parent=0 // loop_header
    %s17 = sphi 0, %s21
    %p18 = scmp.ge.s32.totalorder %s17, 4
    %s24 = sphi 0, %s36
    %s25 = sphi 0, %s32
    %s26 = sphi 0, %s24
    %s27 = sphi 0, %s25
    %s28 = sphi 0, %s26
    %s29 = sphi 0, %s27
    %s41 = sphi 0, %s43
    %s44 = sphi 0, %s41
    %s45 = sphi 0, %s44
    %s61 = sphi 0, %s45
    %s77 = sphi 0, %s79
    %s80 = sphi 0, %s77
    %s81 = sphi 0, %s80
    %s97 = sphi 0, %s81
    %s101 = sphi 0, %s101
    %s103 = sphi 0, %s101
    %s104 = sphi 0, %s103
    %s118 = sphi 0, %s104
    %s122 = sphi 0, %s122
    %s124 = sphi 0, %s122
    %s125 = sphi 0, %s124
    %s139 = sphi 0, %s125
    %s143 = sphi 0, %s143
    %s145 = sphi 0, %s143
    %s146 = sphi 0, %s145
    %s160 = sphi 0, %s146
    %s164 = sphi 0, %s164
    %s166 = sphi 0, %s164
    %s167 = sphi 0, %s166
    %s181 = sphi 0, %s167
    %s185 = sphi 0, %s185
    %s187 = sphi 0, %s185
    %s188 = sphi 0, %s187
    %s202 = sphi 0, %s188
    %s206 = sphi 0, %s206
    %s208 = sphi 0, %s206
    %s209 = sphi 0, %s208
    %s223 = sphi 0, %s209
    %s227 = sphi 0, %s227
    %s229 = sphi 0, %s227
    %s230 = sphi 0, %s229
    %s244 = sphi 0, %s230
    %s248 = sphi 0, %s248
    %s250 = sphi 0, %s248
    %s251 = sphi 0, %s250
    %s265 = sphi 0, %s251
    %s269 = sphi 0, %s269
    %s271 = sphi 0, %s269
    %s272 = sphi 0, %s271
    %s286 = sphi 0, %s272
    %s294 = sphi 0, %s296
    %s297 = sphi 0, %s294
    %s298 = sphi 0, %s297
    %s314 = sphi 0, %s298
  $region4: #{tpu_custom_call.1} parent=0 // loop_header_branch
    %20 = sbr.rel (%p18) target = $region8
  $region5: #{tpu_custom_call.1} parent=0 // loop_body
    %s22 = ssub.s32 %s17, 1
    %s23 = ssub.s32 %s17, 2
    %s30 = sadd.s32 1, %s25
    %p31 = scmp.ge.s32.totalorder %s30, 1
    %s32 = scalar_select %p31, 0, %s30
    %s33 = sadd.s32 1, %s24
    %s34 = scalar_select %p31, %s33, %s24
    %p35 = scmp.ge.s32.totalorder %s34, 2
    %s36 = scalar_select %p35, 0, %s34
    %s37 = ssub.s32 %s24, %s36
    %s38 = ssub.s32 %s25, %s32
    %s39 = sor.u32 %s37, %s38
    %p40 = scmp.eq.s32.totalorder %s39, 0
    %s42 = sadd.s32 %s41, 1
    %s43 = scalar_select %p40, %s41, %s42
    %p46 = pneg %p40
    %p47 = scmp.eq.s32.totalorder %s17, 1
    %p48 = por %p46, %p47
    %p49 = scmp.ne.s32.totalorder %s41, %s44
    %p50 = scmp.eq.s32.totalorder %s17, 0
    %p51 = por %p49, %p50
    %p52 = scmp.ne.s32.totalorder %s41, %s44
    %p53 = scmp.eq.s32.totalorder %s22, 1
    %p54 = por %p52, %p53
    %p55 = scmp.ne.s32.totalorder %s44, %s45
    %p56 = scmp.eq.s32.totalorder %s22, 0
    %p57 = por %p55, %p56
    %p58 = scmp.ne.s32.totalorder %s44, %s45
    %p59 = scmp.eq.s32.totalorder %s23, 1
    %p60 = por %p58, %p59
    %p62 = scmp.ne.s32.totalorder %s45, %s61
    %p63 = scmp.eq.s32.totalorder %s23, 0
    %p64 = por %p62, %p63
    %s65 = sadd.s32 %s25, 1
    %s66 = smul.u32 %s65, 8
    %p67 = scmp.lt.s32.totalorder %s66, 7
    %s68 = scalar_select %p67, %s66, 7
    %s69 = sadd.s32 %s32, 1
    %s70 = smul.u32 %s69, 8
    %p71 = scmp.lt.s32.totalorder %s70, 7
    %s72 = scalar_select %p71, %s70, 7
    %s73 = ssub.s32 %s24, %s36
    %s74 = ssub.s32 %s68, %s72
    %s75 = sor.u32 %s73, %s74
    %p76 = scmp.eq.s32.totalorder %s75, 0
    %s78 = sadd.s32 %s77, 1
    %s79 = scalar_select %p76, %s77, %s78
    %p82 = pneg %p76
    %p83 = scmp.eq.s32.totalorder %s17, 1
    %p84 = por %p82, %p83
    %p85 = scmp.ne.s32.totalorder %s77, %s80
    %p86 = scmp.eq.s32.totalorder %s17, 0
    %p87 = por %p85, %p86
    %p88 = scmp.ne.s32.totalorder %s77, %s80
    %p89 = scmp.eq.s32.totalorder %s22, 1
    %p90 = por %p88, %p89
    %p91 = scmp.ne.s32.totalorder %s80, %s81
    %p92 = scmp.eq.s32.totalorder %s22, 0
    %p93 = por %p91, %p92
    %p94 = scmp.ne.s32.totalorder %s80, %s81
    %p95 = scmp.eq.s32.totalorder %s23, 1
    %p96 = por %p94, %p95
    %p98 = scmp.ne.s32.totalorder %s81, %s97
    %p99 = scmp.eq.s32.totalorder %s23, 0
    %p100 = por %p98, %p99
    %s102 = sadd.s32 %s101, 1
    %p105 = scmp.eq.s32.totalorder %s17, 1
    %p106 = scmp.ne.s32.totalorder %s101, %s103
    %p107 = scmp.eq.s32.totalorder %s17, 0
    %p108 = por %p106, %p107
    %p109 = scmp.ne.s32.totalorder %s101, %s103
    %p110 = scmp.eq.s32.totalorder %s22, 1
    %p111 = por %p109, %p110
    %p112 = scmp.ne.s32.totalorder %s103, %s104
    %p113 = scmp.eq.s32.totalorder %s22, 0
    %p114 = por %p112, %p113
    %p115 = scmp.ne.s32.totalorder %s103, %s104
    %p116 = scmp.eq.s32.totalorder %s23, 1
    %p117 = por %p115, %p116
    %p119 = scmp.ne.s32.totalorder %s104, %s118
    %p120 = scmp.eq.s32.totalorder %s23, 0
    %p121 = por %p119, %p120
    %s123 = sadd.s32 %s122, 1
    %p126 = scmp.eq.s32.totalorder %s17, 1
    %p127 = scmp.ne.s32.totalorder %s122, %s124
    %p128 = scmp.eq.s32.totalorder %s17, 0
    %p129 = por %p127, %p128
    %p130 = scmp.ne.s32.totalorder %s122, %s124
    %p131 = scmp.eq.s32.totalorder %s22, 1
    %p132 = por %p130, %p131
    %p133 = scmp.ne.s32.totalorder %s124, %s125
    %p134 = scmp.eq.s32.totalorder %s22, 0
    %p135 = por %p133, %p134
    %p136 = scmp.ne.s32.totalorder %s124, %s125
    %p137 = scmp.eq.s32.totalorder %s23, 1
    %p138 = por %p136, %p137
    %p140 = scmp.ne.s32.totalorder %s125, %s139
    %p141 = scmp.eq.s32.totalorder %s23, 0
    %p142 = por %p140, %p141
    %s144 = sadd.s32 %s143, 1
    %p147 = scmp.eq.s32.totalorder %s17, 1
    %p148 = scmp.ne.s32.totalorder %s143, %s145
    %p149 = scmp.eq.s32.totalorder %s17, 0
    %p150 = por %p148, %p149
    %p151 = scmp.ne.s32.totalorder %s143, %s145
    %p152 = scmp.eq.s32.totalorder %s22, 1
    %p153 = por %p151, %p152
    %p154 = scmp.ne.s32.totalorder %s145, %s146
    %p155 = scmp.eq.s32.totalorder %s22, 0
    %p156 = por %p154, %p155
    %p157 = scmp.ne.s32.totalorder %s145, %s146
    %p158 = scmp.eq.s32.totalorder %s23, 1
    %p159 = por %p157, %p158
    %p161 = scmp.ne.s32.totalorder %s146, %s160
    %p162 = scmp.eq.s32.totalorder %s23, 0
    %p163 = por %p161, %p162
    %s165 = sadd.s32 %s164, 1
    %p168 = scmp.eq.s32.totalorder %s17, 1
    %p169 = scmp.ne.s32.totalorder %s164, %s166
    %p170 = scmp.eq.s32.totalorder %s17, 0
    %p171 = por %p169, %p170
    %p172 = scmp.ne.s32.totalorder %s164, %s166
    %p173 = scmp.eq.s32.totalorder %s22, 1
    %p174 = por %p172, %p173
    %p175 = scmp.ne.s32.totalorder %s166, %s167
    %p176 = scmp.eq.s32.totalorder %s22, 0
    %p177 = por %p175, %p176
    %p178 = scmp.ne.s32.totalorder %s166, %s167
    %p179 = scmp.eq.s32.totalorder %s23, 1
    %p180 = por %p178, %p179
    %p182 = scmp.ne.s32.totalorder %s167, %s181
    %p183 = scmp.eq.s32.totalorder %s23, 0
    %p184 = por %p182, %p183
    %s186 = sadd.s32 %s185, 1
    %p189 = scmp.eq.s32.totalorder %s17, 1
    %p190 = scmp.ne.s32.totalorder %s185, %s187
    %p191 = scmp.eq.s32.totalorder %s17, 0
    %p192 = por %p190, %p191
    %p193 = scmp.ne.s32.totalorder %s185, %s187
    %p194 = scmp.eq.s32.totalorder %s22, 1
    %p195 = por %p193, %p194
    %p196 = scmp.ne.s32.totalorder %s187, %s188
    %p197 = scmp.eq.s32.totalorder %s22, 0
    %p198 = por %p196, %p197
    %p199 = scmp.ne.s32.totalorder %s187, %s188
    %p200 = scmp.eq.s32.totalorder %s23, 1
    %p201 = por %p199, %p200
    %p203 = scmp.ne.s32.totalorder %s188, %s202
    %p204 = scmp.eq.s32.totalorder %s23, 0
    %p205 = por %p203, %p204
    %s207 = sadd.s32 %s206, 1
    %p210 = scmp.eq.s32.totalorder %s17, 1
    %p211 = scmp.ne.s32.totalorder %s206, %s208
    %p212 = scmp.eq.s32.totalorder %s17, 0
    %p213 = por %p211, %p212
    %p214 = scmp.ne.s32.totalorder %s206, %s208
    %p215 = scmp.eq.s32.totalorder %s22, 1
    %p216 = por %p214, %p215
    %p217 = scmp.ne.s32.totalorder %s208, %s209
    %p218 = scmp.eq.s32.totalorder %s22, 0
    %p219 = por %p217, %p218
    %p220 = scmp.ne.s32.totalorder %s208, %s209
    %p221 = scmp.eq.s32.totalorder %s23, 1
    %p222 = por %p220, %p221
    %p224 = scmp.ne.s32.totalorder %s209, %s223
    %p225 = scmp.eq.s32.totalorder %s23, 0
    %p226 = por %p224, %p225
    %s228 = sadd.s32 %s227, 1
    %p231 = scmp.eq.s32.totalorder %s17, 1
    %p232 = scmp.ne.s32.totalorder %s227, %s229
    %p233 = scmp.eq.s32.totalorder %s17, 0
    %p234 = por %p232, %p233
    %p235 = scmp.ne.s32.totalorder %s227, %s229
    %p236 = scmp.eq.s32.totalorder %s22, 1
    %p237 = por %p235, %p236
    %p238 = scmp.ne.s32.totalorder %s229, %s230
    %p239 = scmp.eq.s32.totalorder %s22, 0
    %p240 = por %p238, %p239
    %p241 = scmp.ne.s32.totalorder %s229, %s230
    %p242 = scmp.eq.s32.totalorder %s23, 1
    %p243 = por %p241, %p242
    %p245 = scmp.ne.s32.totalorder %s230, %s244
    %p246 = scmp.eq.s32.totalorder %s23, 0
    %p247 = por %p245, %p246
    %s249 = sadd.s32 %s248, 1
    %p252 = scmp.eq.s32.totalorder %s17, 1
    %p253 = scmp.ne.s32.totalorder %s248, %s250
    %p254 = scmp.eq.s32.totalorder %s17, 0
    %p255 = por %p253, %p254
    %p256 = scmp.ne.s32.totalorder %s248, %s250
    %p257 = scmp.eq.s32.totalorder %s22, 1
    %p258 = por %p256, %p257
    %p259 = scmp.ne.s32.totalorder %s250, %s251
    %p260 = scmp.eq.s32.totalorder %s22, 0
    %p261 = por %p259, %p260
    %p262 = scmp.ne.s32.totalorder %s250, %s251
    %p263 = scmp.eq.s32.totalorder %s23, 1
    %p264 = por %p262, %p263
    %p266 = scmp.ne.s32.totalorder %s251, %s265
    %p267 = scmp.eq.s32.totalorder %s23, 0
    %p268 = por %p266, %p267
    %s270 = sadd.s32 %s269, 1
    %p273 = scmp.eq.s32.totalorder %s17, 1
    %p274 = scmp.ne.s32.totalorder %s269, %s271
    %p275 = scmp.eq.s32.totalorder %s17, 0
    %p276 = por %p274, %p275
    %p277 = scmp.ne.s32.totalorder %s269, %s271
    %p278 = scmp.eq.s32.totalorder %s22, 1
    %p279 = por %p277, %p278
    %p280 = scmp.ne.s32.totalorder %s271, %s272
    %p281 = scmp.eq.s32.totalorder %s22, 0
    %p282 = por %p280, %p281
    %p283 = scmp.ne.s32.totalorder %s271, %s272
    %p284 = scmp.eq.s32.totalorder %s23, 1
    %p285 = por %p283, %p284
    %p287 = scmp.ne.s32.totalorder %s272, %s286
    %p288 = scmp.eq.s32.totalorder %s23, 0
    %p289 = por %p287, %p288
    %s290 = ssub.s32 %s24, %s36
    %s291 = ssub.s32 %s25, %s32
    %s292 = sor.u32 %s290, %s291
    %p293 = scmp.eq.s32.totalorder %s292, 0
    %s295 = sadd.s32 %s294, 1
    %s296 = scalar_select %p293, %s294, %s295
    %p299 = pneg %p293
    %p300 = scmp.eq.s32.totalorder %s17, 1
    %p301 = por %p299, %p300
    %p302 = scmp.ne.s32.totalorder %s294, %s297
    %p303 = scmp.eq.s32.totalorder %s17, 0
    %p304 = por %p302, %p303
    %p305 = scmp.ne.s32.totalorder %s294, %s297
    %p306 = scmp.eq.s32.totalorder %s22, 1
    %p307 = por %p305, %p306
    %p308 = scmp.ne.s32.totalorder %s297, %s298
    %p309 = scmp.eq.s32.totalorder %s22, 0
    %p310 = por %p308, %p309
    %p311 = scmp.ne.s32.totalorder %s297, %s298
    %p312 = scmp.eq.s32.totalorder %s23, 1
    %p313 = por %p311, %p312
    %p315 = scmp.ne.s32.totalorder %s298, %s314
    %p316 = scmp.eq.s32.totalorder %s23, 0
    %p317 = por %p315, %p316
    %p318 = scmp.le.s32.totalorder 1, %s17
    %p319 = scmp.lt.s32.totalorder %s17, 3
    %p320 = pnand %p318, %p319
    %p321 = pneg %p320
    // Predicated region
    $region9: #{tpu_custom_call.1} parent=5 // pred_check
      _
    $region10: #{tpu_custom_call.1} parent=5 // pred_check_branch
      %323 = sbr.rel (%p320) target = $region12
    $region11: #{tpu_custom_call.1} parent=5 // pred_region
      %s324 = ssub.s32 %s17, 1
      // Predicated region
      $region13: #{tpu_custom_call.1} parent=11 // pred_check
        %p325 = pneg %p114
      $region14: #{tpu_custom_call.1} parent=11 // pred_check_branch
        %327 = sbr.rel (%p325) target = $region16
      $region15: #{tpu_custom_call.1} parent=11 // pred_region
        _
      $region16: #{tpu_custom_call.1} parent=11 // pred_fallthru
        _
      // Predicated region
      $region17: #{tpu_custom_call.1} parent=11 // pred_check
        %p328 = pneg %p135
      $region18: #{tpu_custom_call.1} parent=11 // pred_check_branch
        %330 = sbr.rel (%p328) target = $region20
      $region19: #{tpu_custom_call.1} parent=11 // pred_region
        _
      $region20: #{tpu_custom_call.1} parent=11 // pred_fallthru
        _
      // Predicated region
      $region21: #{tpu_custom_call.1} parent=11 // pred_check
        %p331 = pneg %p156
      $region22: #{tpu_custom_call.1} parent=11 // pred_check_branch
        %333 = sbr.rel (%p331) target = $region24
      $region23: #{tpu_custom_call.1} parent=11 // pred_region
        _
      $region24: #{tpu_custom_call.1} parent=11 // pred_fallthru
        _
      // Predicated region
      $region25: #{tpu_custom_call.1} parent=11 // pred_check
        %p334 = pneg %p177
      $region26: #{tpu_custom_call.1} parent=11 // pred_check_branch
        %336 = sbr.rel (%p334) target = $region28
      $region27: #{tpu_custom_call.1} parent=11 // pred_region
        _
      $region28: #{tpu_custom_call.1} parent=11 // pred_fallthru
        _
      // Predicated region
      $region29: #{tpu_custom_call.1} parent=11 // pred_check
        %p337 = pneg %p198
      $region30: #{tpu_custom_call.1} parent=11 // pred_check_branch
        %339 = sbr.rel (%p337) target = $region32
      $region31: #{tpu_custom_call.1} parent=11 // pred_region
        _
      $region32: #{tpu_custom_call.1} parent=11 // pred_fallthru
        _
      // Predicated region
      $region33: #{tpu_custom_call.1} parent=11 // pred_check
        %p340 = pneg %p219
      $region34: #{tpu_custom_call.1} parent=11 // pred_check_branch
        %342 = sbr.rel (%p340) target = $region36
      $region35: #{tpu_custom_call.1} parent=11 // pred_region
        _
      $region36: #{tpu_custom_call.1} parent=11 // pred_fallthru
        _
      // Predicated region
      $region37: #{tpu_custom_call.1} parent=11 // pred_check
        %p343 = pneg %p240
      $region38: #{tpu_custom_call.1} parent=11 // pred_check_branch
        %345 = sbr.rel (%p343) target = $region40
      $region39: #{tpu_custom_call.1} parent=11 // pred_region
        _
      $region40: #{tpu_custom_call.1} parent=11 // pred_fallthru
        _
      // Predicated region
      $region41: #{tpu_custom_call.1} parent=11 // pred_check
        %p346 = pneg %p261
      $region42: #{tpu_custom_call.1} parent=11 // pred_check_branch
        %348 = sbr.rel (%p346) target = $region44
      $region43: #{tpu_custom_call.1} parent=11 // pred_region
        _
      $region44: #{tpu_custom_call.1} parent=11 // pred_fallthru
        _
      // Predicated region
      $region45: #{tpu_custom_call.1} parent=11 // pred_check
        %p349 = pneg %p282
      $region46: #{tpu_custom_call.1} parent=11 // pred_check_branch
        %351 = sbr.rel (%p349) target = $region48
      $region47: #{tpu_custom_call.1} parent=11 // pred_region
        _
      $region48: #{tpu_custom_call.1} parent=11 // pred_fallthru
        _
    $region12: #{tpu_custom_call.1} parent=5 // pred_fallthru
      _
    %p352 = scmp.lt.s32.totalorder %s17, 2
    // Predicated region
    $region49: #{tpu_custom_call.1} parent=5 // pred_check
      %p353 = pneg %p352
    $region50: #{tpu_custom_call.1} parent=5 // pred_check_branch
      %355 = sbr.rel (%p353) target = $region52
    $region51: #{tpu_custom_call.1} parent=5 // pred_region
      // Predicated region
      $region53: #{tpu_custom_call.1} parent=51 // pred_check
        %p356 = pneg %p51
      $region54: #{tpu_custom_call.1} parent=51 // pred_check_branch
        %358 = sbr.rel (%p356) target = $region56
      $region55: #{tpu_custom_call.1} parent=51 // pred_region
        %s359 = smul.u32 8, %s25
        %p360 = scmp.lt.s32.totalorder %s24, 1
        %s361 = scalar_select %p360, %s24, 1
        %p362 = scmp.lt.s32.totalorder %s359, 7
        %s363 = scalar_select %p362, %s359, 7
        %s364 = smul.addr %s361, 8
        %s365 = sadd.s32 %s363, %s364
        %s366 = smul.addr %s365, 8
        %s367 = scalar_lea.vmem %s0, %s366
        %s368 = smul.u32 8, %s25
      $region56: #{tpu_custom_call.1} parent=51 // pred_fallthru
        _
      // Predicated region
      $region57: #{tpu_custom_call.1} parent=51 // pred_check
        %p369 = pneg %p87
      $region58: #{tpu_custom_call.1} parent=51 // pred_check_branch
        %371 = sbr.rel (%p369) target = $region60
      $region59: #{tpu_custom_call.1} parent=51 // pred_region
        %s372 = sadd.s32 %s25, 1
        %s373 = smul.u32 %s372, 8
        %p374 = scmp.lt.s32.totalorder %s373, 7
        %s375 = scalar_select %p374, %s373, 7
        %p376 = scmp.lt.s32.totalorder %s24, 1
        %s377 = scalar_select %p376, %s24, 1
        %p378 = scmp.lt.s32.totalorder %s375, 7
        %s379 = scalar_select %p378, %s375, 7
        %s380 = smul.addr %s377, 8
        %s381 = sadd.s32 %s379, %s380
        %s382 = smul.addr %s381, 8
        %s383 = scalar_lea.vmem %s1, %s382
        %s384 = sadd.s32 %s25, 1
        %s385 = smul.u32 %s384, 8
        %p386 = scmp.lt.s32.totalorder %s385, 7
        %s387 = scalar_select %p386, %s385, 7
      $region60: #{tpu_custom_call.1} parent=51 // pred_fallthru
        _
    $region52: #{tpu_custom_call.1} parent=5 // pred_fallthru
      _
    %p388 = scmp.le.s32.totalorder 1, %s17
    %p389 = scmp.lt.s32.totalorder %s17, 3
    %p390 = pnand %p388, %p389
    %p391 = pneg %p390
    // Predicated region
    $region61: #{tpu_custom_call.1} parent=5 // pred_check
      _
    $region62: #{tpu_custom_call.1} parent=5 // pred_check_branch
      %393 = sbr.rel (%p390) target = $region64
    $region63: #{tpu_custom_call.1} parent=5 // pred_region
      %s394 = ssub.s32 %s17, 1
      %s395 = smul.u32 8, %s27
      %p396 = scmp.lt.s32.totalorder %s26, 1
      %s397 = scalar_select %p396, %s26, 1
      %p398 = scmp.lt.s32.totalorder %s395, 7
      %s399 = scalar_select %p398, %s395, 7
      %s400 = smul.addr %s397, 8
      %s401 = sadd.s32 %s399, %s400
      %s402 = smul.addr %s401, 8
      %s403 = scalar_lea.vmem %s0, %s402
      %p404 = pneg %p57
      %p405 = pneg %p54
      %s406 = sadd.s32 %s27, 1
      %s407 = smul.u32 %s406, 8
      %p408 = scmp.lt.s32.totalorder %s407, 7
      %s409 = scalar_select %p408, %s407, 7
      %p410 = scmp.lt.s32.totalorder %s26, 1
      %s411 = scalar_select %p410, %s26, 1
      %p412 = scmp.lt.s32.totalorder %s409, 7
      %s413 = scalar_select %p412, %s409, 7
      %s414 = smul.addr %s411, 8
      %s415 = sadd.s32 %s413, %s414
      %s416 = smul.addr %s415, 8
      %s417 = scalar_lea.vmem %s1, %s416
      %p418 = pneg %p93
      %p419 = pneg %p90
      %p420 = pneg %p114
      %p421 = pneg %p111
      %p422 = pneg %p135
      %p423 = pneg %p132
      %p424 = pneg %p156
      %p425 = pneg %p153
      %p426 = pneg %p177
      %p427 = pneg %p174
      %p428 = pneg %p198
      %p429 = pneg %p195
      %p430 = pneg %p219
      %p431 = pneg %p216
      %p432 = pneg %p240
      %p433 = pneg %p237
      %p434 = pneg %p261
      %p435 = pneg %p258
      %p436 = pneg %p282
      %p437 = pneg %p279
      %p438 = pneg %p310
      %p439 = pneg %p307
      %s440 = smul.u32 8, %s27
      %p441 = scmp.lt.s32.totalorder %s26, 1
      %s442 = scalar_select %p441, %s26, 1
      %p443 = scmp.lt.s32.totalorder %s440, 7
      %s444 = scalar_select %p443, %s440, 7
      %s445 = smul.addr %s442, 8
      %s446 = sadd.s32 %s444, %s445
      %s447 = smul.addr %s446, 8
      %s448 = scalar_lea.vmem %s11, %s447
      %s449 = smul.u32 8, %s27
      %p450 = scmp.lt.s32.totalorder %s26, 1
      %s451 = scalar_select %p450, %s26, 1
      %p452 = scmp.lt.s32.totalorder %s449, 7
      %s453 = scalar_select %p452, %s449, 7
      %s454 = smul.addr %s451, 8
      %s455 = sadd.s32 %s453, %s454
      %s456 = smul.addr %s455, 8
      %s457 = scalar_lea.vmem %s0, %s456
      %s458 = smul.u32 8, %s27
      %s459 = sadd.s32 %s27, 1
      %s460 = smul.u32 %s459, 8
      %p461 = scmp.lt.s32.totalorder %s460, 7
      %s462 = scalar_select %p461, %s460, 7
      %p463 = scmp.lt.s32.totalorder %s26, 1
      %s464 = scalar_select %p463, %s26, 1
      %p465 = scmp.lt.s32.totalorder %s462, 7
      %s466 = scalar_select %p465, %s462, 7
      %s467 = smul.addr %s464, 8
      %s468 = sadd.s32 %s466, %s467
      %s469 = smul.addr %s468, 8
      %s470 = scalar_lea.vmem %s1, %s469
      %s471 = sadd.s32 %s27, 1
      %s472 = smul.u32 %s471, 8
      %p473 = scmp.lt.s32.totalorder %s472, 7
      %s474 = scalar_select %p473, %s472, 7
      %s475 = smul.u32 8, %s27
      %p476 = scmp.lt.s32.totalorder %s26, 1
      %s477 = scalar_select %p476, %s26, 1
      %p478 = scmp.lt.s32.totalorder %s475, 7
      %s479 = scalar_select %p478, %s475, 7
      %s480 = smul.addr %s477, 8
      %s481 = sadd.s32 %s479, %s480
      %s482 = smul.addr %s481, 8
      %s483 = scalar_lea.vmem %s11, %s482
      %s484 = smul.u32 8, %s27
      %v485 = vld [vmem:[%s457] sm:$0xff]
      %v486 = vld [vmem:[%s457 + $0x8] sm:$0xff]
      %v487 = vld [vmem:[%s457 + $0x10] sm:$0xff]
      %v488 = vld [vmem:[%s457 + $0x18] sm:$0xff]
      %v489 = vld [vmem:[%s457 + $0x20] sm:$0xff]
      %v490 = vld [vmem:[%s457 + $0x28] sm:$0xff]
      %v491 = vld [vmem:[%s457 + $0x30] sm:$0xff]
      %v492 = vld [vmem:[%s457 + $0x38] sm:$0xff]
      %v493 = vld [vmem:[%s2] sm:$0xff]
      %v494 = vld [vmem:[%s2 + $0x8] sm:$0xff]
      %v495 = vld [vmem:[%s3] sm:$0x1]
      %v497 = vlaneseq
      %v498 = vshrl.u32 %v497, 7
      %v499 = vsub.s32 0, %v498
      %v500 = vrot.slane %v495, %v499
      %vm502 = vcmask 130048
      %v504 = vsel %vm502, %v485, 0
      %v507 = vsel %vm502, %v486, 0
      %v510 = vsel %vm502, %v487, 0
      %v513 = vsel %vm502, %v488, 0
      %v516 = vsel %vm502, %v489, 0
      %v519 = vsel %vm502, %v490, 0
      %v522 = vsel %vm502, %v491, 0
      %v525 = vsel %vm502, %v492, 0
      %527 = vmatprep.subr.mxu0 0.0
      %528 = vmatpush1.msra.mxu0 0.0
      %529 = vmatprep.subr.mxu0 0.0
      %530 = vmatpush1.msra.mxu0 0.0
      %531 = vmatprep.subr.mxu0 0.0
      %532 = vmatpush1.msra.mxu0 0.0
      %533 = vmatprep.subr.mxu0 0.0
      %534 = vmatpush1.msra.mxu0 0.0
      %535 = vmatprep.subr.mxu0 0.0
      %536 = vmatpush1.msra.mxu0 0.0
      %537 = vmatprep.subr.mxu0 0.0
      %538 = vmatpush1.msra.mxu0 0.0
      %539 = vmatprep.subr.mxu0 0.0
      %540 = vmatpush1.msra.mxu0 0.0
      %541 = vmatprep.subr.mxu0 0.0
      %542 = vmatpush1.msra.mxu0 0.0
      %543 = vmatprep.subr.mxu0 0.0
      %544 = vmatpush1.msra.mxu0 0.0
      %545 = vmatprep.subr.mxu0 0.0
      %546 = vmatpush1.msra.mxu0 0.0
      %547 = vmatprep.subr.mxu0 0.0
      %548 = vmatpush1.msra.mxu0 0.0
      %549 = vmatprep.subr.mxu0 0.0
      %550 = vmatpush1.msra.mxu0 0.0
      %551 = vmatprep.subr.mxu0 0.0
      %552 = vmatpush1.msra.mxu0 0.0
      %553 = vmatprep.subr.mxu0 0.0
      %554 = vmatpush1.msra.mxu0 0.0
      %555 = vmatprep.subr.mxu0 0.0
      %556 = vmatpush1.msra.mxu0 %v494
      %557 = vmatprep.subr.mxu0 0.0
      %558 = vmatpush1.msra.mxu0 %v493
      %559 = vmatprep.subr.mxu0 0.0
      %560 = vmatpush2.msra.mxu0 0.0
      %561 = vmatprep.subr.mxu0 0.0
      %562 = vmatpush2.msra.mxu0 0.0
      %563 = vmatprep.subr.mxu0 0.0
      %564 = vmatpush2.msra.mxu0 0.0
      %565 = vmatprep.subr.mxu0 0.0
      %566 = vmatpush2.msra.mxu0 0.0
      %567 = vmatprep.subr.mxu0 0.0
      %568 = vmatpush2.msra.mxu0 0.0
      %569 = vmatprep.subr.mxu0 0.0
      %570 = vmatpush2.msra.mxu0 0.0
      %571 = vmatprep.subr.mxu0 0.0
      %572 = vmatpush2.msra.mxu0 0.0
      %573 = vmatprep.subr.mxu0 0.0
      %574 = vmatpush2.msra.mxu0 0.0
      %575 = vmatprep.subr.mxu0 0.0
      %576 = vmatpush2.msra.mxu0 0.0
      %577 = vmatprep.subr.mxu0 0.0
      %578 = vmatpush2.msra.mxu0 0.0
      %579 = vmatprep.subr.mxu0 0.0
      %580 = vmatpush2.msra.mxu0 0.0
      %581 = vmatprep.subr.mxu0 0.0
      %582 = vmatpush2.msra.mxu0 0.0
      %583 = vmatprep.subr.mxu0 0.0
      %584 = vmatpush2.msra.mxu0 0.0
      %585 = vmatprep.subr.mxu0 0.0
      %586 = vmatpush2.msra.mxu0 0.0
      %587 = vmatprep.subr.mxu0 0.0
      %588 = vmatpush2.msra.mxu0 0.0
      %589 = vmatprep.subr.mxu0 0.0
      %590 = vmatpush2.msra.mxu0 0.0
      %591 = vmatprep.mubr.f32.mxu0 0.0
      %592 = vmatmul.mubr.f32.gmra.mxu0 %v504
      %v593 = vpop.f32.mrf.mxu0
      %v594 = vadd.f32 %v500, %v593
      %v595 = vpop.f32.mrf.mxu0
      %596 = vmatprep.mubr.f32.mxu0 0.0
      %597 = vmatmul.mubr.f32.gmra.mxu0 %v507
      %v598 = vpop.f32.mrf.mxu0
      %v599 = vadd.f32 %v500, %v598
      %v600 = vpop.f32.mrf.mxu0
      %601 = vmatprep.mubr.f32.mxu0 0.0
      %602 = vmatmul.mubr.f32.gmra.mxu0 %v510
      %v603 = vpop.f32.mrf.mxu0
      %v604 = vadd.f32 %v500, %v603
      %v605 = vpop.f32.mrf.mxu0
      %606 = vmatprep.mubr.f32.mxu0 0.0
      %607 = vmatmul.mubr.f32.gmra.mxu0 %v513
      %v608 = vpop.f32.mrf.mxu0
      %v609 = vadd.f32 %v500, %v608
      %v610 = vpop.f32.mrf.mxu0
      %611 = vmatprep.mubr.f32.mxu0 0.0
      %612 = vmatmul.mubr.f32.gmra.mxu0 %v516
      %v613 = vpop.f32.mrf.mxu0
      %v614 = vadd.f32 %v500, %v613
      %v615 = vpop.f32.mrf.mxu0
      %616 = vmatprep.mubr.f32.mxu0 0.0
      %617 = vmatmul.mubr.f32.gmra.mxu0 %v519
      %v618 = vpop.f32.mrf.mxu0
      %v619 = vadd.f32 %v500, %v618
      %v620 = vpop.f32.mrf.mxu0
      %621 = vmatprep.mubr.f32.mxu0 0.0
      %622 = vmatmul.mubr.f32.gmra.mxu0 %v522
      %v623 = vpop.f32.mrf.mxu0
      %v624 = vadd.f32 %v500, %v623
      %v625 = vpop.f32.mrf.mxu0
      %626 = vmatprep.mubr.f32.mxu0 0.0
      %627 = vmatmul.mubr.f32.gmra.mxu0 %v525
      %v628 = vpop.f32.mrf.mxu0
      %v629 = vadd.f32 %v500, %v628
      %v630 = vpop.f32.mrf.mxu0
      %631 = vdwg.mxu0
      %v632 = vmax.f32 %v594, 0.0
      %v633 = vmax.f32 %v599, 0.0
      %v634 = vmax.f32 %v604, 0.0
      %v635 = vmax.f32 %v609, 0.0
      %v636 = vmax.f32 %v614, 0.0
      %v637 = vmax.f32 %v619, 0.0
      %v638 = vmax.f32 %v624, 0.0
      %v639 = vmax.f32 %v629, 0.0
      %v640 = vld [vmem:[%s470] sm:$0xff]
      %v642 = vsel %vm502, %v640, 0
      %644 = vmatprep.subr.mxu0 0.0
      %645 = vmatpush1.msra.mxu0 0.0
      %646 = vmatprep.subr.mxu0 0.0
      %647 = vmatpush1.msra.mxu0 0.0
      %648 = vmatprep.subr.mxu0 0.0
      %649 = vmatpush1.msra.mxu0 0.0
      %650 = vmatprep.subr.mxu0 0.0
      %651 = vmatpush1.msra.mxu0 0.0
      %652 = vmatprep.subr.mxu0 0.0
      %653 = vmatpush1.msra.mxu0 0.0
      %654 = vmatprep.subr.mxu0 0.0
      %655 = vmatpush1.msra.mxu0 0.0
      %656 = vmatprep.subr.mxu0 0.0
      %657 = vmatpush1.msra.mxu0 0.0
      %658 = vmatprep.subr.mxu0 0.0
      %659 = vmatpush1.msra.mxu0 0.0
      %660 = vmatprep.subr.mxu0 0.0
      %661 = vmatpush1.msra.mxu0 0.0
      %662 = vmatprep.subr.mxu0 0.0
      %663 = vmatpush1.msra.mxu0 0.0
      %664 = vmatprep.subr.mxu0 0.0
      %665 = vmatpush1.msra.mxu0 0.0
      %666 = vmatprep.subr.mxu0 0.0
      %667 = vmatpush1.msra.mxu0 0.0
      %668 = vmatprep.subr.mxu0 0.0
      %669 = vmatpush1.msra.mxu0 0.0
      %670 = vmatprep.subr.mxu0 0.0
      %671 = vmatpush1.msra.mxu0 0.0
      %672 = vmatprep.subr.mxu0 0.0
      %673 = vmatpush1.msra.mxu0 %v494
      %674 = vmatprep.subr.mxu0 0.0
      %675 = vmatpush1.msra.mxu0 %v493
      %676 = vmatprep.subr.mxu0 0.0
      %677 = vmatpush2.msra.mxu0 0.0
      %678 = vmatprep.subr.mxu0 0.0
      %679 = vmatpush2.msra.mxu0 0.0
      %680 = vmatprep.subr.mxu0 0.0
      %681 = vmatpush2.msra.mxu0 0.0
      %682 = vmatprep.subr.mxu0 0.0
      %683 = vmatpush2.msra.mxu0 0.0
      %684 = vmatprep.subr.mxu0 0.0
      %685 = vmatpush2.msra.mxu0 0.0
      %686 = vmatprep.subr.mxu0 0.0
      %687 = vmatpush2.msra.mxu0 0.0
      %688 = vmatprep.subr.mxu0 0.0
      %689 = vmatpush2.msra.mxu0 0.0
      %690 = vmatprep.subr.mxu0 0.0
      %691 = vmatpush2.msra.mxu0 0.0
      %692 = vmatprep.subr.mxu0 0.0
      %693 = vmatpush2.msra.mxu0 0.0
      %694 = vmatprep.subr.mxu0 0.0
      %695 = vmatpush2.msra.mxu0 0.0
      %696 = vmatprep.subr.mxu0 0.0
      %697 = vmatpush2.msra.mxu0 0.0
      %698 = vmatprep.subr.mxu0 0.0
      %699 = vmatpush2.msra.mxu0 0.0
      %700 = vmatprep.subr.mxu0 0.0
      %701 = vmatpush2.msra.mxu0 0.0
      %702 = vmatprep.subr.mxu0 0.0
      %703 = vmatpush2.msra.mxu0 0.0
      %704 = vmatprep.subr.mxu0 0.0
      %705 = vmatpush2.msra.mxu0 0.0
      %706 = vmatprep.subr.mxu0 0.0
      %707 = vmatpush2.msra.mxu0 0.0
      %708 = vmatprep.mubr.f32.mxu0 0.0
      %709 = vmatmul.mubr.f32.gmra.mxu0 %v642
      %v710 = vpop.f32.mrf.mxu0
      %v711 = vadd.f32 %v500, %v710
      %v712 = vpop.f32.mrf.mxu0
      %713 = vdwg.mxu0
      %v714 = vmax.f32 %v711, 0.0
      %vm715 = vcmask 31744
      %716 = vst.msk [vmem:[#allocation2] sm:$0xff] %vm715, %v632
      %717 = vst.msk [vmem:[#allocation2 + $0x8] sm:$0xff] %vm715, %v633
      %718 = vst.msk [vmem:[#allocation2 + $0x10] sm:$0xff] %vm715, %v634
      %719 = vst.msk [vmem:[#allocation2 + $0x18] sm:$0xff] %vm715, %v635
      %720 = vst.msk [vmem:[#allocation2 + $0x20] sm:$0xff] %vm715, %v636
      %721 = vst.msk [vmem:[#allocation2 + $0x28] sm:$0xff] %vm715, %v637
      %722 = vst.msk [vmem:[#allocation2 + $0x30] sm:$0xff] %vm715, %v638
      %723 = vst.msk [vmem:[#allocation2 + $0x38] sm:$0xff] %vm715, %v639
      %724 = vst.msk [vmem:[#allocation2 + $0x40] sm:$0xff] %vm715, %v714
      %v725 = vlaneseq
      %v726 = vshrl.u32 %v725, 7
      %v727 = vadd.s32 %v726, 8
      %v728 = vadd.s32 %v726, 16
      %v729 = vadd.s32 %v726, 24
      %v730 = vadd.s32 %v726, 32
      %v731 = vadd.s32 %v726, 40
      %v732 = vadd.s32 %v726, 48
      %v733 = vadd.s32 %v726, 56
      %vm734 = vcmp.lt.s32.totalorder %v726, 0
      %v735 = vsub.s32 0, %v726
      %v736 = vsel %vm734, %v735, %v726
      %v737 = vshrl.u32 %v736, 3
      %v738 = vand.u32 %v736, 7
      %v739 = vsub.s32 0, %v738
      %v740 = vsel %vm734, %v739, %v738
      %vm741 = vcmp.lt.s32.totalorder %v727, 0
      %v742 = vsub.s32 0, %v727
      %v743 = vsel %vm741, %v742, %v727
      %v744 = vshrl.u32 %v743, 3
      %v745 = vand.u32 %v743, 7
      %v746 = vsub.s32 0, %v745
      %v747 = vsel %vm741, %v746, %v745
      %vm748 = vcmp.lt.s32.totalorder %v728, 0
      %v749 = vsub.s32 0, %v728
      %v750 = vsel %vm748, %v749, %v728
      %v751 = vshrl.u32 %v750, 3
      %v752 = vand.u32 %v750, 7
      %v753 = vsub.s32 0, %v752
      %v754 = vsel %vm748, %v753, %v752
      %vm755 = vcmp.lt.s32.totalorder %v729, 0
      %v756 = vsub.s32 0, %v729
      %v757 = vsel %vm755, %v756, %v729
      %v758 = vshrl.u32 %v757, 3
      %v759 = vand.u32 %v757, 7
      %v760 = vsub.s32 0, %v759
      %v761 = vsel %vm755, %v760, %v759
      %vm762 = vcmp.lt.s32.totalorder %v730, 0
      %v763 = vsub.s32 0, %v730
      %v764 = vsel %vm762, %v763, %v730
      %v765 = vshrl.u32 %v764, 3
      %v766 = vand.u32 %v764, 7
      %v767 = vsub.s32 0, %v766
      %v768 = vsel %vm762, %v767, %v766
      %vm769 = vcmp.lt.s32.totalorder %v731, 0
      %v770 = vsub.s32 0, %v731
      %v771 = vsel %vm769, %v770, %v731
      %v772 = vshrl.u32 %v771, 3
      %v773 = vand.u32 %v771, 7
      %v774 = vsub.s32 0, %v773
      %v775 = vsel %vm769, %v774, %v773
      %vm776 = vcmp.lt.s32.totalorder %v732, 0
      %v777 = vsub.s32 0, %v732
      %v778 = vsel %vm776, %v777, %v732
      %v779 = vshrl.u32 %v778, 3
      %v780 = vand.u32 %v778, 7
      %v781 = vsub.s32 0, %v780
      %v782 = vsel %vm776, %v781, %v780
      %vm783 = vcmp.lt.s32.totalorder %v733, 0
      %v784 = vsub.s32 0, %v733
      %v785 = vsel %vm783, %v784, %v733
      %v786 = vshrl.u32 %v785, 3
      %v787 = vand.u32 %v785, 7
      %v788 = vsub.s32 0, %v787
      %v789 = vsel %vm783, %v788, %v787
      %vm790 = vcmp.ne.s32.totalorder %v740, 0
      %vm791 = vcmp.ne.s32.totalorder %v747, 0
      %vm792 = vcmp.ne.s32.totalorder %v754, 0
      %vm793 = vcmp.ne.s32.totalorder %v761, 0
      %vm794 = vcmp.ne.s32.totalorder %v768, 0
      %vm795 = vcmp.ne.s32.totalorder %v775, 0
      %vm796 = vcmp.ne.s32.totalorder %v782, 0
      %vm797 = vcmp.ne.s32.totalorder %v789, 0
      %vm798 = vcmp.lt.s32.totalorder %v740, 0
      %vm799 = vcmp.lt.s32.totalorder %v747, 0
      %vm800 = vcmp.lt.s32.totalorder %v754, 0
      %vm801 = vcmp.lt.s32.totalorder %v761, 0
      %vm802 = vcmp.lt.s32.totalorder %v768, 0
      %vm803 = vcmp.lt.s32.totalorder %v775, 0
      %vm804 = vcmp.lt.s32.totalorder %v782, 0
      %vm805 = vcmp.lt.s32.totalorder %v789, 0
      %vm806 = vmand %vm798, %vm790
      %vm807 = vmand %vm799, %vm791
      %vm808 = vmand %vm800, %vm792
      %vm809 = vmand %vm801, %vm793
      %vm810 = vmand %vm802, %vm794
      %vm811 = vmand %vm803, %vm795
      %vm812 = vmand %vm804, %vm796
      %vm813 = vmand %vm805, %vm797
      %v814 = vadd.s32 %v740, 8
      %v815 = vadd.s32 %v747, 8
      %v816 = vadd.s32 %v754, 8
      %v817 = vadd.s32 %v761, 8
      %v818 = vadd.s32 %v768, 8
      %v819 = vadd.s32 %v775, 8
      %v820 = vadd.s32 %v782, 8
      %v821 = vadd.s32 %v789, 8
      %v822 = vsel %vm806, %v814, %v740
      %v823 = vsel %vm807, %v815, %v747
      %v824 = vsel %vm808, %v816, %v754
      %v825 = vsel %vm809, %v817, %v761
      %v826 = vsel %vm810, %v818, %v768
      %v827 = vsel %vm811, %v819, %v775
      %v828 = vsel %vm812, %v820, %v782
      %v829 = vsel %vm813, %v821, %v789
      %vm830 = vcmp.ne.s32.totalorder %v822, 7
      %vm831 = vcmp.ne.s32.totalorder %v823, 7
      %vm832 = vcmp.ne.s32.totalorder %v824, 7
      %vm833 = vcmp.ne.s32.totalorder %v825, 7
      %vm834 = vcmp.ne.s32.totalorder %v826, 7
      %vm835 = vcmp.ne.s32.totalorder %v827, 7
      %vm836 = vcmp.ne.s32.totalorder %v828, 7
      %vm837 = vcmp.ne.s32.totalorder %v829, 7
      %s838 = smul.u32 %s27, 64
      %v839 = vstv %s838
      %v840 = vadd.s32 %v839, %v726
      %v841 = vadd.s32 %v839, %v727
      %v842 = vadd.s32 %v839, %v728
      %v843 = vadd.s32 %v839, %v729
      %v844 = vadd.s32 %v839, %v730
      %v845 = vadd.s32 %v839, %v731
      %v846 = vadd.s32 %v839, %v732
      %v847 = vadd.s32 %v839, %v733
      %vm848 = vcmp.lt.s32.totalorder %v840, 56
      %vm849 = vcmp.lt.s32.totalorder %v841, 56
      %vm850 = vcmp.lt.s32.totalorder %v842, 56
      %vm851 = vcmp.lt.s32.totalorder %v843, 56
      %vm852 = vcmp.lt.s32.totalorder %v844, 56
      %vm853 = vcmp.lt.s32.totalorder %v845, 56
      %vm854 = vcmp.lt.s32.totalorder %v846, 56
      %vm855 = vcmp.lt.s32.totalorder %v847, 56
      %v856 = vld [vmem:[#allocation2 + $0x8] sm:$0xff]
      %v857 = vld [vmem:[#allocation2 + $0x10] sm:$0xff]
      %v858 = vld [vmem:[#allocation2 + $0x18] sm:$0xff]
      %v859 = vld [vmem:[#allocation2 + $0x20] sm:$0xff]
      %v860 = vld [vmem:[#allocation2 + $0x28] sm:$0xff]
      %v861 = vld [vmem:[#allocation2 + $0x30] sm:$0xff]
      %v862 = vld [vmem:[#allocation2 + $0x38] sm:$0xff]
      %v863 = vld [vmem:[#allocation2 + $0x40] sm:$0xff]
      %v864 = vsel %vm848, 1, 0
      %v865 = vsel %vm849, 1, 0
      %v866 = vsel %vm850, 1, 0
      %v867 = vsel %vm851, 1, 0
      %v868 = vsel %vm852, 1, 0
      %v869 = vsel %vm853, 1, 0
      %v870 = vsel %vm854, 1, 0
      %v871 = vsel %vm855, 1, 0
      %vm872 = vcmp.eq.s32.totalorder %v864, 1
      %vm873 = vcmp.eq.s32.totalorder %v865, 1
      %vm874 = vcmp.eq.s32.totalorder %v866, 1
      %vm875 = vcmp.eq.s32.totalorder %v867, 1
      %vm876 = vcmp.eq.s32.totalorder %v868, 1
      %vm877 = vcmp.eq.s32.totalorder %v869, 1
      %vm878 = vcmp.eq.s32.totalorder %v870, 1
      %vm879 = vcmp.eq.s32.totalorder %v871, 1
      %v880 = vsel %vm872, %v856, 0.0
      %v881 = vsel %vm873, %v857, 0.0
      %v882 = vsel %vm874, %v858, 0.0
      %v883 = vsel %vm875, %v859, 0.0
      %v884 = vsel %vm876, %v860, 0.0
      %v885 = vsel %vm877, %v861, 0.0
      %v886 = vsel %vm878, %v862, 0.0
      %v887 = vsel %vm879, %v863, 0.0
      %v888 = vrot.slane %v632, 1
      %v889 = vrot.slane %v633, 1
      %v890 = vrot.slane %v634, 1
      %v891 = vrot.slane %v635, 1
      %v892 = vrot.slane %v636, 1
      %v893 = vrot.slane %v637, 1
      %v894 = vrot.slane %v638, 1
      %v895 = vrot.slane %v639, 1
      %vm896 = vcmp.lt.s32.totalorder %v726, 7
      %v897 = vsel %vm896, %v894, %v895
      %v898 = vsel %vm896, %v893, %v894
      %v899 = vsel %vm896, %v892, %v893
      %v900 = vsel %vm896, %v891, %v892
      %v901 = vsel %vm896, %v890, %v891
      %v902 = vsel %vm896, %v889, %v890
      %v903 = vsel %vm896, %v888, %v889
      %v904 = vsel %vm896, %v895, %v888
      %v905 = vsel %vm830, 1, 0
      %v906 = vsel %vm831, 1, 0
      %v907 = vsel %vm832, 1, 0
      %v908 = vsel %vm833, 1, 0
      %v909 = vsel %vm834, 1, 0
      %v910 = vsel %vm835, 1, 0
      %v911 = vsel %vm836, 1, 0
      %v912 = vsel %vm837, 1, 0
      %vm913 = vcmp.eq.s32.totalorder %v905, 1
      %vm914 = vcmp.eq.s32.totalorder %v906, 1
      %vm915 = vcmp.eq.s32.totalorder %v907, 1
      %vm916 = vcmp.eq.s32.totalorder %v908, 1
      %vm917 = vcmp.eq.s32.totalorder %v909, 1
      %vm918 = vcmp.eq.s32.totalorder %v910, 1
      %vm919 = vcmp.eq.s32.totalorder %v911, 1
      %vm920 = vcmp.eq.s32.totalorder %v912, 1
      %v921 = vsel %vm913, %v903, 0.0
      %v922 = vsel %vm914, %v902, 0.0
      %v923 = vsel %vm915, %v901, 0.0
      %v924 = vsel %vm916, %v900, 0.0
      %v925 = vsel %vm917, %v899, 0.0
      %v926 = vsel %vm918, %v898, 0.0
      %v927 = vsel %vm919, %v897, 0.0
      %v928 = vsel %vm920, %v904, 0.0
      %vm929 = vmand %vm848, %vm830
      %vm930 = vmand %vm849, %vm831
      %vm931 = vmand %vm850, %vm832
      %vm932 = vmand %vm851, %vm833
      %vm933 = vmand %vm852, %vm834
      %vm934 = vmand %vm853, %vm835
      %vm935 = vmand %vm854, %vm836
      %vm936 = vmand %vm855, %vm837
      %v937 = vrot.slane %v856, 1
      %v938 = vrot.slane %v857, 1
      %v939 = vrot.slane %v858, 1
      %v940 = vrot.slane %v859, 1
      %v941 = vrot.slane %v860, 1
      %v942 = vrot.slane %v861, 1
      %v943 = vrot.slane %v862, 1
      %v944 = vrot.slane %v863, 1
      %v945 = vsel %vm896, %v943, %v944
      %v946 = vsel %vm896, %v942, %v943
      %v947 = vsel %vm896, %v941, %v942
      %v948 = vsel %vm896, %v940, %v941
      %v949 = vsel %vm896, %v939, %v940
      %v950 = vsel %vm896, %v938, %v939
      %v951 = vsel %vm896, %v937, %v938
      %v952 = vsel %vm896, %v944, %v937
      %v953 = vsel %vm929, 1, 0
      %v954 = vsel %vm930, 1, 0
      %v955 = vsel %vm931, 1, 0
      %v956 = vsel %vm932, 1, 0
      %v957 = vsel %vm933, 1, 0
      %v958 = vsel %vm934, 1, 0
      %v959 = vsel %vm935, 1, 0
      %v960 = vsel %vm936, 1, 0
      %vm961 = vcmp.eq.s32.totalorder %v953, 1
      %vm962 = vcmp.eq.s32.totalorder %v954, 1
      %vm963 = vcmp.eq.s32.totalorder %v955, 1
      %vm964 = vcmp.eq.s32.totalorder %v956, 1
      %vm965 = vcmp.eq.s32.totalorder %v957, 1
      %vm966 = vcmp.eq.s32.totalorder %v958, 1
      %vm967 = vcmp.eq.s32.totalorder %v959, 1
      %vm968 = vcmp.eq.s32.totalorder %v960, 1
      %v969 = vsel %vm961, %v951, 0.0
      %v970 = vsel %vm962, %v950, 0.0
      %v971 = vsel %vm963, %v949, 0.0
      %v972 = vsel %vm964, %v948, 0.0
      %v973 = vsel %vm965, %v947, 0.0
      %v974 = vsel %vm966, %v946, 0.0
      %v975 = vsel %vm967, %v945, 0.0
      %v976 = vsel %vm968, %v952, 0.0
      %v977 = vld [vmem:[%s4] sm:$0xf]
      %v979 = vsel %vm715, %v632, 0
      %v982 = vsel %vm715, %v633, 0
      %v985 = vsel %vm715, %v634, 0
      %v988 = vsel %vm715, %v635, 0
      %v991 = vsel %vm715, %v636, 0
      %v994 = vsel %vm715, %v637, 0
      %v997 = vsel %vm715, %v638, 0
      %v1000 = vsel %vm715, %v639, 0
      %vm1002 = vcmask 1043456
      %v1004 = vsel %vm1002, %v977, 0
      %1006 = vmatprep.subr.mxu0 0.0
      %1007 = vmatpush1.msra.mxu0 0.0
      %1008 = vmatprep.subr.mxu0 0.0
      %1009 = vmatpush1.msra.mxu0 0.0
      %1010 = vmatprep.subr.mxu0 0.0
      %1011 = vmatpush1.msra.mxu0 0.0
      %1012 = vmatprep.subr.mxu0 0.0
      %1013 = vmatpush1.msra.mxu0 0.0
      %1014 = vmatprep.subr.mxu0 0.0
      %1015 = vmatpush1.msra.mxu0 0.0
      %1016 = vmatprep.subr.mxu0 0.0
      %1017 = vmatpush1.msra.mxu0 0.0
      %1018 = vmatprep.subr.mxu0 0.0
      %1019 = vmatpush1.msra.mxu0 0.0
      %1020 = vmatprep.subr.mxu0 0.0
      %1021 = vmatpush1.msra.mxu0 0.0
      %1022 = vmatprep.subr.mxu0 0.0
      %1023 = vmatpush1.msra.mxu0 0.0
      %1024 = vmatprep.subr.mxu0 0.0
      %1025 = vmatpush1.msra.mxu0 0.0
      %1026 = vmatprep.subr.mxu0 0.0
      %1027 = vmatpush1.msra.mxu0 0.0
      %1028 = vmatprep.subr.mxu0 0.0
      %1029 = vmatpush1.msra.mxu0 0.0
      %1030 = vmatprep.subr.mxu0 0.0
      %1031 = vmatpush1.msra.mxu0 0.0
      %1032 = vmatprep.subr.mxu0 0.0
      %1033 = vmatpush1.msra.mxu0 0.0
      %1034 = vmatprep.subr.mxu0 0.0
      %1035 = vmatpush1.msra.mxu0 0.0
      %1036 = vmatprep.subr.mxu0 0.0
      %1037 = vmatpush1.msra.mxu0 %v1004
      %1038 = vmatprep.subr.mxu0 0.0
      %1039 = vmatpush2.msra.mxu0 0.0
      %1040 = vmatprep.subr.mxu0 0.0
      %1041 = vmatpush2.msra.mxu0 0.0
      %1042 = vmatprep.subr.mxu0 0.0
      %1043 = vmatpush2.msra.mxu0 0.0
      %1044 = vmatprep.subr.mxu0 0.0
      %1045 = vmatpush2.msra.mxu0 0.0
      %1046 = vmatprep.subr.mxu0 0.0
      %1047 = vmatpush2.msra.mxu0 0.0
      %1048 = vmatprep.subr.mxu0 0.0
      %1049 = vmatpush2.msra.mxu0 0.0
      %1050 = vmatprep.subr.mxu0 0.0
      %1051 = vmatpush2.msra.mxu0 0.0
      %1052 = vmatprep.subr.mxu0 0.0
      %1053 = vmatpush2.msra.mxu0 0.0
      %1054 = vmatprep.subr.mxu0 0.0
      %1055 = vmatpush2.msra.mxu0 0.0
      %1056 = vmatprep.subr.mxu0 0.0
      %1057 = vmatpush2.msra.mxu0 0.0
      %1058 = vmatprep.subr.mxu0 0.0
      %1059 = vmatpush2.msra.mxu0 0.0
      %1060 = vmatprep.subr.mxu0 0.0
      %1061 = vmatpush2.msra.mxu0 0.0
      %1062 = vmatprep.subr.mxu0 0.0
      %1063 = vmatpush2.msra.mxu0 0.0
      %1064 = vmatprep.subr.mxu0 0.0
      %1065 = vmatpush2.msra.mxu0 0.0
      %1066 = vmatprep.subr.mxu0 0.0
      %1067 = vmatpush2.msra.mxu0 0.0
      %1068 = vmatprep.subr.mxu0 0.0
      %1069 = vmatpush2.msra.mxu0 0.0
      %1070 = vmatprep.mubr.f32.mxu0 0.0
      %1071 = vmatmul.mubr.f32.gmra.mxu0 %v979
      %v1072 = vpop.f32.mrf.mxu0
      %v1073 = vadd.f32 0.0, %v1072
      %v1074 = vpop.f32.mrf.mxu0
      %1075 = vmatprep.mubr.f32.mxu0 0.0
      %1076 = vmatmul.mubr.f32.gmra.mxu0 %v982
      %v1077 = vpop.f32.mrf.mxu0
      %v1078 = vadd.f32 0.0, %v1077
      %v1079 = vpop.f32.mrf.mxu0
      %1080 = vmatprep.mubr.f32.mxu0 0.0
      %1081 = vmatmul.mubr.f32.gmra.mxu0 %v985
      %v1082 = vpop.f32.mrf.mxu0
      %v1083 = vadd.f32 0.0, %v1082
      %v1084 = vpop.f32.mrf.mxu0
      %1085 = vmatprep.mubr.f32.mxu0 0.0
      %1086 = vmatmul.mubr.f32.gmra.mxu0 %v988
      %v1087 = vpop.f32.mrf.mxu0
      %v1088 = vadd.f32 0.0, %v1087
      %v1089 = vpop.f32.mrf.mxu0
      %1090 = vmatprep.mubr.f32.mxu0 0.0
      %1091 = vmatmul.mubr.f32.gmra.mxu0 %v991
      %v1092 = vpop.f32.mrf.mxu0
      %v1093 = vadd.f32 0.0, %v1092
      %v1094 = vpop.f32.mrf.mxu0
      %1095 = vmatprep.mubr.f32.mxu0 0.0
      %1096 = vmatmul.mubr.f32.gmra.mxu0 %v994
      %v1097 = vpop.f32.mrf.mxu0
      %v1098 = vadd.f32 0.0, %v1097
      %v1099 = vpop.f32.mrf.mxu0
      %1100 = vmatprep.mubr.f32.mxu0 0.0
      %1101 = vmatmul.mubr.f32.gmra.mxu0 %v997
      %v1102 = vpop.f32.mrf.mxu0
      %v1103 = vadd.f32 0.0, %v1102
      %v1104 = vpop.f32.mrf.mxu0
      %1105 = vmatprep.mubr.f32.mxu0 0.0
      %1106 = vmatmul.mubr.f32.gmra.mxu0 %v1000
      %v1107 = vpop.f32.mrf.mxu0
      %v1108 = vadd.f32 0.0, %v1107
      %v1109 = vpop.f32.mrf.mxu0
      %1110 = vdwg.mxu0
      %v1111 = vld [vmem:[%s5] sm:$0xf]
      %v1113 = vsel %vm715, %v921, 0
      %v1116 = vsel %vm715, %v922, 0
      %v1119 = vsel %vm715, %v923, 0
      %v1122 = vsel %vm715, %v924, 0
      %v1125 = vsel %vm715, %v925, 0
      %v1128 = vsel %vm715, %v926, 0
      %v1131 = vsel %vm715, %v927, 0
      %v1134 = vsel %vm715, %v928, 0
      %v1137 = vsel %vm1002, %v1111, 0
      %1139 = vmatprep.subr.mxu0 0.0
      %1140 = vmatpush1.msra.mxu0 0.0
      %1141 = vmatprep.subr.mxu0 0.0
      %1142 = vmatpush1.msra.mxu0 0.0
      %1143 = vmatprep.subr.mxu0 0.0
      %1144 = vmatpush1.msra.mxu0 0.0
      %1145 = vmatprep.subr.mxu0 0.0
      %1146 = vmatpush1.msra.mxu0 0.0
      %1147 = vmatprep.subr.mxu0 0.0
      %1148 = vmatpush1.msra.mxu0 0.0
      %1149 = vmatprep.subr.mxu0 0.0
      %1150 = vmatpush1.msra.mxu0 0.0
      %1151 = vmatprep.subr.mxu0 0.0
      %1152 = vmatpush1.msra.mxu0 0.0
      %1153 = vmatprep.subr.mxu0 0.0
      %1154 = vmatpush1.msra.mxu0 0.0
      %1155 = vmatprep.subr.mxu0 0.0
      %1156 = vmatpush1.msra.mxu0 0.0
      %1157 = vmatprep.subr.mxu0 0.0
      %1158 = vmatpush1.msra.mxu0 0.0
      %1159 = vmatprep.subr.mxu0 0.0
      %1160 = vmatpush1.msra.mxu0 0.0
      %1161 = vmatprep.subr.mxu0 0.0
      %1162 = vmatpush1.msra.mxu0 0.0
      %1163 = vmatprep.subr.mxu0 0.0
      %1164 = vmatpush1.msra.mxu0 0.0
      %1165 = vmatprep.subr.mxu0 0.0
      %1166 = vmatpush1.msra.mxu0 0.0
      %1167 = vmatprep.subr.mxu0 0.0
      %1168 = vmatpush1.msra.mxu0 0.0
      %1169 = vmatprep.subr.mxu0 0.0
      %1170 = vmatpush1.msra.mxu0 %v1137
      %1171 = vmatprep.subr.mxu0 0.0
      %1172 = vmatpush2.msra.mxu0 0.0
      %1173 = vmatprep.subr.mxu0 0.0
      %1174 = vmatpush2.msra.mxu0 0.0
      %1175 = vmatprep.subr.mxu0 0.0
      %1176 = vmatpush2.msra.mxu0 0.0
      %1177 = vmatprep.subr.mxu0 0.0
      %1178 = vmatpush2.msra.mxu0 0.0
      %1179 = vmatprep.subr.mxu0 0.0
      %1180 = vmatpush2.msra.mxu0 0.0
      %1181 = vmatprep.subr.mxu0 0.0
      %1182 = vmatpush2.msra.mxu0 0.0
      %1183 = vmatprep.subr.mxu0 0.0
      %1184 = vmatpush2.msra.mxu0 0.0
      %1185 = vmatprep.subr.mxu0 0.0
      %1186 = vmatpush2.msra.mxu0 0.0
      %1187 = vmatprep.subr.mxu0 0.0
      %1188 = vmatpush2.msra.mxu0 0.0
      %1189 = vmatprep.subr.mxu0 0.0
      %1190 = vmatpush2.msra.mxu0 0.0
      %1191 = vmatprep.subr.mxu0 0.0
      %1192 = vmatpush2.msra.mxu0 0.0
      %1193 = vmatprep.subr.mxu0 0.0
      %1194 = vmatpush2.msra.mxu0 0.0
      %1195 = vmatprep.subr.mxu0 0.0
      %1196 = vmatpush2.msra.mxu0 0.0
      %1197 = vmatprep.subr.mxu0 0.0
      %1198 = vmatpush2.msra.mxu0 0.0
      %1199 = vmatprep.subr.mxu0 0.0
      %1200 = vmatpush2.msra.mxu0 0.0
      %1201 = vmatprep.subr.mxu0 0.0
      %1202 = vmatpush2.msra.mxu0 0.0
      %1203 = vmatprep.mubr.f32.mxu0 0.0
      %1204 = vmatmul.mubr.f32.gmra.mxu0 %v1113
      %v1205 = vpop.f32.mrf.mxu0
      %v1206 = vadd.f32 0.0, %v1205
      %v1207 = vpop.f32.mrf.mxu0
      %1208 = vmatprep.mubr.f32.mxu0 0.0
      %1209 = vmatmul.mubr.f32.gmra.mxu0 %v1116
      %v1210 = vpop.f32.mrf.mxu0
      %v1211 = vadd.f32 0.0, %v1210
      %v1212 = vpop.f32.mrf.mxu0
      %1213 = vmatprep.mubr.f32.mxu0 0.0
      %1214 = vmatmul.mubr.f32.gmra.mxu0 %v1119
      %v1215 = vpop.f32.mrf.mxu0
      %v1216 = vadd.f32 0.0, %v1215
      %v1217 = vpop.f32.mrf.mxu0
      %1218 = vmatprep.mubr.f32.mxu0 0.0
      %1219 = vmatmul.mubr.f32.gmra.mxu0 %v1122
      %v1220 = vpop.f32.mrf.mxu0
      %v1221 = vadd.f32 0.0, %v1220
      %v1222 = vpop.f32.mrf.mxu0
      %1223 = vmatprep.mubr.f32.mxu0 0.0
      %1224 = vmatmul.mubr.f32.gmra.mxu0 %v1125
      %v1225 = vpop.f32.mrf.mxu0
      %v1226 = vadd.f32 0.0, %v1225
      %v1227 = vpop.f32.mrf.mxu0
      %1228 = vmatprep.mubr.f32.mxu0 0.0
      %1229 = vmatmul.mubr.f32.gmra.mxu0 %v1128
      %v1230 = vpop.f32.mrf.mxu0
      %v1231 = vadd.f32 0.0, %v1230
      %v1232 = vpop.f32.mrf.mxu0
      %1233 = vmatprep.mubr.f32.mxu0 0.0
      %1234 = vmatmul.mubr.f32.gmra.mxu0 %v1131
      %v1235 = vpop.f32.mrf.mxu0
      %v1236 = vadd.f32 0.0, %v1235
      %v1237 = vpop.f32.mrf.mxu0
      %1238 = vmatprep.mubr.f32.mxu0 0.0
      %1239 = vmatmul.mubr.f32.gmra.mxu0 %v1134
      %v1240 = vpop.f32.mrf.mxu0
      %v1241 = vadd.f32 0.0, %v1240
      %v1242 = vpop.f32.mrf.mxu0
      %1243 = vdwg.mxu0
      %v1244 = vld [vmem:[%s6] sm:$0xf]
      %v1246 = vsel %vm715, %v880, 0
      %v1249 = vsel %vm715, %v881, 0
      %v1252 = vsel %vm715, %v882, 0
      %v1255 = vsel %vm715, %v883, 0
      %v1258 = vsel %vm715, %v884, 0
      %v1261 = vsel %vm715, %v885, 0
      %v1264 = vsel %vm715, %v886, 0
      %v1267 = vsel %vm715, %v887, 0
      %v1270 = vsel %vm1002, %v1244, 0
      %1272 = vmatprep.subr.mxu0 0.0
      %1273 = vmatpush1.msra.mxu0 0.0
      %1274 = vmatprep.subr.mxu0 0.0
      %1275 = vmatpush1.msra.mxu0 0.0
      %1276 = vmatprep.subr.mxu0 0.0
      %1277 = vmatpush1.msra.mxu0 0.0
      %1278 = vmatprep.subr.mxu0 0.0
      %1279 = vmatpush1.msra.mxu0 0.0
      %1280 = vmatprep.subr.mxu0 0.0
      %1281 = vmatpush1.msra.mxu0 0.0
      %1282 = vmatprep.subr.mxu0 0.0
      %1283 = vmatpush1.msra.mxu0 0.0
      %1284 = vmatprep.subr.mxu0 0.0
      %1285 = vmatpush1.msra.mxu0 0.0
      %1286 = vmatprep.subr.mxu0 0.0
      %1287 = vmatpush1.msra.mxu0 0.0
      %1288 = vmatprep.subr.mxu0 0.0
      %1289 = vmatpush1.msra.mxu0 0.0
      %1290 = vmatprep.subr.mxu0 0.0
      %1291 = vmatpush1.msra.mxu0 0.0
      %1292 = vmatprep.subr.mxu0 0.0
      %1293 = vmatpush1.msra.mxu0 0.0
      %1294 = vmatprep.subr.mxu0 0.0
      %1295 = vmatpush1.msra.mxu0 0.0
      %1296 = vmatprep.subr.mxu0 0.0
      %1297 = vmatpush1.msra.mxu0 0.0
      %1298 = vmatprep.subr.mxu0 0.0
      %1299 = vmatpush1.msra.mxu0 0.0
      %1300 = vmatprep.subr.mxu0 0.0
      %1301 = vmatpush1.msra.mxu0 0.0
      %1302 = vmatprep.subr.mxu0 0.0
      %1303 = vmatpush1.msra.mxu0 %v1270
      %1304 = vmatprep.subr.mxu0 0.0
      %1305 = vmatpush2.msra.mxu0 0.0
      %1306 = vmatprep.subr.mxu0 0.0
      %1307 = vmatpush2.msra.mxu0 0.0
      %1308 = vmatprep.subr.mxu0 0.0
      %1309 = vmatpush2.msra.mxu0 0.0
      %1310 = vmatprep.subr.mxu0 0.0
      %1311 = vmatpush2.msra.mxu0 0.0
      %1312 = vmatprep.subr.mxu0 0.0
      %1313 = vmatpush2.msra.mxu0 0.0
      %1314 = vmatprep.subr.mxu0 0.0
      %1315 = vmatpush2.msra.mxu0 0.0
      %1316 = vmatprep.subr.mxu0 0.0
      %1317 = vmatpush2.msra.mxu0 0.0
      %1318 = vmatprep.subr.mxu0 0.0
      %1319 = vmatpush2.msra.mxu0 0.0
      %1320 = vmatprep.subr.mxu0 0.0
      %1321 = vmatpush2.msra.mxu0 0.0
      %1322 = vmatprep.subr.mxu0 0.0
      %1323 = vmatpush2.msra.mxu0 0.0
      %1324 = vmatprep.subr.mxu0 0.0
      %1325 = vmatpush2.msra.mxu0 0.0
      %1326 = vmatprep.subr.mxu0 0.0
      %1327 = vmatpush2.msra.mxu0 0.0
      %1328 = vmatprep.subr.mxu0 0.0
      %1329 = vmatpush2.msra.mxu0 0.0
      %1330 = vmatprep.subr.mxu0 0.0
      %1331 = vmatpush2.msra.mxu0 0.0
      %1332 = vmatprep.subr.mxu0 0.0
      %1333 = vmatpush2.msra.mxu0 0.0
      %1334 = vmatprep.subr.mxu0 0.0
      %1335 = vmatpush2.msra.mxu0 0.0
      %1336 = vmatprep.mubr.f32.mxu0 0.0
      %1337 = vmatmul.mubr.f32.gmra.mxu0 %v1246
      %v1338 = vpop.f32.mrf.mxu0
      %v1339 = vadd.f32 0.0, %v1338
      %v1340 = vpop.f32.mrf.mxu0
      %1341 = vmatprep.mubr.f32.mxu0 0.0
      %1342 = vmatmul.mubr.f32.gmra.mxu0 %v1249
      %v1343 = vpop.f32.mrf.mxu0
      %v1344 = vadd.f32 0.0, %v1343
      %v1345 = vpop.f32.mrf.mxu0
      %1346 = vmatprep.mubr.f32.mxu0 0.0
      %1347 = vmatmul.mubr.f32.gmra.mxu0 %v1252
      %v1348 = vpop.f32.mrf.mxu0
      %v1349 = vadd.f32 0.0, %v1348
      %v1350 = vpop.f32.mrf.mxu0
      %1351 = vmatprep.mubr.f32.mxu0 0.0
      %1352 = vmatmul.mubr.f32.gmra.mxu0 %v1255
      %v1353 = vpop.f32.mrf.mxu0
      %v1354 = vadd.f32 0.0, %v1353
      %v1355 = vpop.f32.mrf.mxu0
      %1356 = vmatprep.mubr.f32.mxu0 0.0
      %1357 = vmatmul.mubr.f32.gmra.mxu0 %v1258
      %v1358 = vpop.f32.mrf.mxu0
      %v1359 = vadd.f32 0.0, %v1358
      %v1360 = vpop.f32.mrf.mxu0
      %1361 = vmatprep.mubr.f32.mxu0 0.0
      %1362 = vmatmul.mubr.f32.gmra.mxu0 %v1261
      %v1363 = vpop.f32.mrf.mxu0
      %v1364 = vadd.f32 0.0, %v1363
      %v1365 = vpop.f32.mrf.mxu0
      %1366 = vmatprep.mubr.f32.mxu0 0.0
      %1367 = vmatmul.mubr.f32.gmra.mxu0 %v1264
      %v1368 = vpop.f32.mrf.mxu0
      %v1369 = vadd.f32 0.0, %v1368
      %v1370 = vpop.f32.mrf.mxu0
      %1371 = vmatprep.mubr.f32.mxu0 0.0
      %1372 = vmatmul.mubr.f32.gmra.mxu0 %v1267
      %v1373 = vpop.f32.mrf.mxu0
      %v1374 = vadd.f32 0.0, %v1373
      %v1375 = vpop.f32.mrf.mxu0
      %1376 = vdwg.mxu0
      %v1377 = vld [vmem:[%s7] sm:$0xf]
      %v1379 = vsel %vm715, %v969, 0
      %v1382 = vsel %vm715, %v970, 0
      %v1385 = vsel %vm715, %v971, 0
      %v1388 = vsel %vm715, %v972, 0
      %v1391 = vsel %vm715, %v973, 0
      %v1394 = vsel %vm715, %v974, 0
      %v1397 = vsel %vm715, %v975, 0
      %v1400 = vsel %vm715, %v976, 0
      %v1403 = vsel %vm1002, %v1377, 0
      %1405 = vmatprep.subr.mxu0 0.0
      %1406 = vmatpush1.msra.mxu0 0.0
      %1407 = vmatprep.subr.mxu0 0.0
      %1408 = vmatpush1.msra.mxu0 0.0
      %1409 = vmatprep.subr.mxu0 0.0
      %1410 = vmatpush1.msra.mxu0 0.0
      %1411 = vmatprep.subr.mxu0 0.0
      %1412 = vmatpush1.msra.mxu0 0.0
      %1413 = vmatprep.subr.mxu0 0.0
      %1414 = vmatpush1.msra.mxu0 0.0
      %1415 = vmatprep.subr.mxu0 0.0
      %1416 = vmatpush1.msra.mxu0 0.0
      %1417 = vmatprep.subr.mxu0 0.0
      %1418 = vmatpush1.msra.mxu0 0.0
      %1419 = vmatprep.subr.mxu0 0.0
      %1420 = vmatpush1.msra.mxu0 0.0
      %1421 = vmatprep.subr.mxu0 0.0
      %1422 = vmatpush1.msra.mxu0 0.0
      %1423 = vmatprep.subr.mxu0 0.0
      %1424 = vmatpush1.msra.mxu0 0.0
      %1425 = vmatprep.subr.mxu0 0.0
      %1426 = vmatpush1.msra.mxu0 0.0
      %1427 = vmatprep.subr.mxu0 0.0
      %1428 = vmatpush1.msra.mxu0 0.0
      %1429 = vmatprep.subr.mxu0 0.0
      %1430 = vmatpush1.msra.mxu0 0.0
      %1431 = vmatprep.subr.mxu0 0.0
      %1432 = vmatpush1.msra.mxu0 0.0
      %1433 = vmatprep.subr.mxu0 0.0
      %1434 = vmatpush1.msra.mxu0 0.0
      %1435 = vmatprep.subr.mxu0 0.0
      %1436 = vmatpush1.msra.mxu0 %v1403
      %1437 = vmatprep.subr.mxu0 0.0
      %1438 = vmatpush2.msra.mxu0 0.0
      %1439 = vmatprep.subr.mxu0 0.0
      %1440 = vmatpush2.msra.mxu0 0.0
      %1441 = vmatprep.subr.mxu0 0.0
      %1442 = vmatpush2.msra.mxu0 0.0
      %1443 = vmatprep.subr.mxu0 0.0
      %1444 = vmatpush2.msra.mxu0 0.0
      %1445 = vmatprep.subr.mxu0 0.0
      %1446 = vmatpush2.msra.mxu0 0.0
      %1447 = vmatprep.subr.mxu0 0.0
      %1448 = vmatpush2.msra.mxu0 0.0
      %1449 = vmatprep.subr.mxu0 0.0
      %1450 = vmatpush2.msra.mxu0 0.0
      %1451 = vmatprep.subr.mxu0 0.0
      %1452 = vmatpush2.msra.mxu0 0.0
      %1453 = vmatprep.subr.mxu0 0.0
      %1454 = vmatpush2.msra.mxu0 0.0
      %1455 = vmatprep.subr.mxu0 0.0
      %1456 = vmatpush2.msra.mxu0 0.0
      %1457 = vmatprep.subr.mxu0 0.0
      %1458 = vmatpush2.msra.mxu0 0.0
      %1459 = vmatprep.subr.mxu0 0.0
      %1460 = vmatpush2.msra.mxu0 0.0
      %1461 = vmatprep.subr.mxu0 0.0
      %1462 = vmatpush2.msra.mxu0 0.0
      %1463 = vmatprep.subr.mxu0 0.0
      %1464 = vmatpush2.msra.mxu0 0.0
      %1465 = vmatprep.subr.mxu0 0.0
      %1466 = vmatpush2.msra.mxu0 0.0
      %1467 = vmatprep.subr.mxu0 0.0
      %1468 = vmatpush2.msra.mxu0 0.0
      %1469 = vmatprep.mubr.f32.mxu0 0.0
      %1470 = vmatmul.mubr.f32.gmra.mxu0 %v1379
      %v1471 = vpop.f32.mrf.mxu0
      %v1472 = vadd.f32 0.0, %v1471
      %v1473 = vpop.f32.mrf.mxu0
      %1474 = vmatprep.mubr.f32.mxu0 0.0
      %1475 = vmatmul.mubr.f32.gmra.mxu0 %v1382
      %v1476 = vpop.f32.mrf.mxu0
      %v1477 = vadd.f32 0.0, %v1476
      %v1478 = vpop.f32.mrf.mxu0
      %1479 = vmatprep.mubr.f32.mxu0 0.0
      %1480 = vmatmul.mubr.f32.gmra.mxu0 %v1385
      %v1481 = vpop.f32.mrf.mxu0
      %v1482 = vadd.f32 0.0, %v1481
      %v1483 = vpop.f32.mrf.mxu0
      %1484 = vmatprep.mubr.f32.mxu0 0.0
      %1485 = vmatmul.mubr.f32.gmra.mxu0 %v1388
      %v1486 = vpop.f32.mrf.mxu0
      %v1487 = vadd.f32 0.0, %v1486
      %v1488 = vpop.f32.mrf.mxu0
      %1489 = vmatprep.mubr.f32.mxu0 0.0
      %1490 = vmatmul.mubr.f32.gmra.mxu0 %v1391
      %v1491 = vpop.f32.mrf.mxu0
      %v1492 = vadd.f32 0.0, %v1491
      %v1493 = vpop.f32.mrf.mxu0
      %1494 = vmatprep.mubr.f32.mxu0 0.0
      %1495 = vmatmul.mubr.f32.gmra.mxu0 %v1394
      %v1496 = vpop.f32.mrf.mxu0
      %v1497 = vadd.f32 0.0, %v1496
      %v1498 = vpop.f32.mrf.mxu0
      %1499 = vmatprep.mubr.f32.mxu0 0.0
      %1500 = vmatmul.mubr.f32.gmra.mxu0 %v1397
      %v1501 = vpop.f32.mrf.mxu0
      %v1502 = vadd.f32 0.0, %v1501
      %v1503 = vpop.f32.mrf.mxu0
      %1504 = vmatprep.mubr.f32.mxu0 0.0
      %1505 = vmatmul.mubr.f32.gmra.mxu0 %v1400
      %v1506 = vpop.f32.mrf.mxu0
      %v1507 = vadd.f32 0.0, %v1506
      %v1508 = vpop.f32.mrf.mxu0
      %1509 = vdwg.mxu0
      %1518 = vrot.lane.b32.xlu0 %v1206, 4
      %v1519 = vpop.permute.xlu0 %1518
      %1520 = vrot.lane.b32.xlu0 %v1211, 4
      %v1521 = vpop.permute.xlu0 %1520
      %1522 = vrot.lane.b32.xlu0 %v1216, 4
      %v1523 = vpop.permute.xlu0 %1522
      %1524 = vrot.lane.b32.xlu0 %v1221, 4
      %v1525 = vpop.permute.xlu0 %1524
      %1526 = vrot.lane.b32.xlu0 %v1226, 4
      %v1527 = vpop.permute.xlu0 %1526
      %1528 = vrot.lane.b32.xlu0 %v1231, 4
      %v1529 = vpop.permute.xlu0 %1528
      %1530 = vrot.lane.b32.xlu0 %v1236, 4
      %v1531 = vpop.permute.xlu0 %1530
      %1532 = vrot.lane.b32.xlu0 %v1241, 4
      %v1533 = vpop.permute.xlu0 %1532
      %v1542 = vadd.f32 %v1073, %v1519
      %v1543 = vadd.f32 %v1078, %v1521
      %v1544 = vadd.f32 %v1083, %v1523
      %v1545 = vadd.f32 %v1088, %v1525
      %v1546 = vadd.f32 %v1093, %v1527
      %v1547 = vadd.f32 %v1098, %v1529
      %v1548 = vadd.f32 %v1103, %v1531
      %v1549 = vadd.f32 %v1108, %v1533
      %1558 = vrot.lane.b32.xlu0 %v1339, 8
      %v1559 = vpop.permute.xlu0 %1558
      %1560 = vrot.lane.b32.xlu0 %v1344, 8
      %v1561 = vpop.permute.xlu0 %1560
      %1562 = vrot.lane.b32.xlu0 %v1349, 8
      %v1563 = vpop.permute.xlu0 %1562
      %1564 = vrot.lane.b32.xlu0 %v1354, 8
      %v1565 = vpop.permute.xlu0 %1564
      %1566 = vrot.lane.b32.xlu0 %v1359, 8
      %v1567 = vpop.permute.xlu0 %1566
      %1568 = vrot.lane.b32.xlu0 %v1364, 8
      %v1569 = vpop.permute.xlu0 %1568
      %1570 = vrot.lane.b32.xlu0 %v1369, 8
      %v1571 = vpop.permute.xlu0 %1570
      %1572 = vrot.lane.b32.xlu0 %v1374, 8
      %v1573 = vpop.permute.xlu0 %1572
      %v1582 = vadd.f32 %v1073, %v1559
      %v1583 = vadd.f32 %v1078, %v1561
      %v1584 = vadd.f32 %v1083, %v1563
      %v1585 = vadd.f32 %v1088, %v1565
      %v1586 = vadd.f32 %v1093, %v1567
      %v1587 = vadd.f32 %v1098, %v1569
      %v1588 = vadd.f32 %v1103, %v1571
      %v1589 = vadd.f32 %v1108, %v1573
      %1590 = vrot.lane.b32.xlu0 %v1206, 8
      %v1591 = vpop.permute.xlu0 %1590
      %1592 = vrot.lane.b32.xlu0 %v1211, 8
      %v1593 = vpop.permute.xlu0 %1592
      %1594 = vrot.lane.b32.xlu0 %v1216, 8
      %v1595 = vpop.permute.xlu0 %1594
      %1596 = vrot.lane.b32.xlu0 %v1221, 8
      %v1597 = vpop.permute.xlu0 %1596
      %1598 = vrot.lane.b32.xlu0 %v1226, 8
      %v1599 = vpop.permute.xlu0 %1598
      %1600 = vrot.lane.b32.xlu0 %v1231, 8
      %v1601 = vpop.permute.xlu0 %1600
      %1602 = vrot.lane.b32.xlu0 %v1236, 8
      %v1603 = vpop.permute.xlu0 %1602
      %1604 = vrot.lane.b32.xlu0 %v1241, 8
      %v1605 = vpop.permute.xlu0 %1604
      %v1614 = vadd.f32 %v1073, %v1591
      %v1615 = vadd.f32 %v1078, %v1593
      %v1616 = vadd.f32 %v1083, %v1595
      %v1617 = vadd.f32 %v1088, %v1597
      %v1618 = vadd.f32 %v1093, %v1599
      %v1619 = vadd.f32 %v1098, %v1601
      %v1620 = vadd.f32 %v1103, %v1603
      %v1621 = vadd.f32 %v1108, %v1605
      %v1622 = vadd.f32 %v1614, %v1559
      %v1623 = vadd.f32 %v1615, %v1561
      %v1624 = vadd.f32 %v1616, %v1563
      %v1625 = vadd.f32 %v1617, %v1565
      %v1626 = vadd.f32 %v1618, %v1567
      %v1627 = vadd.f32 %v1619, %v1569
      %v1628 = vadd.f32 %v1620, %v1571
      %v1629 = vadd.f32 %v1621, %v1573
      %1638 = vrot.lane.b32.xlu0 %v1472, 12
      %v1639 = vpop.permute.xlu0 %1638
      %1640 = vrot.lane.b32.xlu0 %v1477, 12
      %v1641 = vpop.permute.xlu0 %1640
      %1642 = vrot.lane.b32.xlu0 %v1482, 12
      %v1643 = vpop.permute.xlu0 %1642
      %1644 = vrot.lane.b32.xlu0 %v1487, 12
      %v1645 = vpop.permute.xlu0 %1644
      %1646 = vrot.lane.b32.xlu0 %v1492, 12
      %v1647 = vpop.permute.xlu0 %1646
      %1648 = vrot.lane.b32.xlu0 %v1497, 12
      %v1649 = vpop.permute.xlu0 %1648
      %1650 = vrot.lane.b32.xlu0 %v1502, 12
      %v1651 = vpop.permute.xlu0 %1650
      %1652 = vrot.lane.b32.xlu0 %v1507, 12
      %v1653 = vpop.permute.xlu0 %1652
      %v1662 = vadd.f32 %v1622, %v1639
      %v1663 = vadd.f32 %v1623, %v1641
      %v1664 = vadd.f32 %v1624, %v1643
      %v1665 = vadd.f32 %v1625, %v1645
      %v1666 = vadd.f32 %v1626, %v1647
      %v1667 = vadd.f32 %v1627, %v1649
      %v1668 = vadd.f32 %v1628, %v1651
      %v1669 = vadd.f32 %v1629, %v1653
      %v1670 = vld [vmem:[%s8] sm:$0x1]
      %v1671 = vld [vmem:[%s9] sm:$0xf]
      %v1672 = vld [vmem:[%s10] sm:$0x1]
      %v1674 = vlaneseq
      %v1675 = vshrl.u32 %v1674, 7
      %v1676 = vsub.s32 0, %v1675
      %v1677 = vrot.slane %v1670, %v1676
      %v1679 = vadd.f32 %v1073, %v1677
      %v1680 = vadd.f32 %v1078, %v1677
      %v1681 = vadd.f32 %v1083, %v1677
      %v1682 = vadd.f32 %v1088, %v1677
      %v1683 = vadd.f32 %v1093, %v1677
      %v1684 = vadd.f32 %v1098, %v1677
      %v1685 = vadd.f32 %v1103, %v1677
      %v1686 = vadd.f32 %v1108, %v1677
      %v1687 = vmax.f32 %v1679, 0.0
      %v1688 = vmax.f32 %v1680, 0.0
      %v1689 = vmax.f32 %v1681, 0.0
      %v1690 = vmax.f32 %v1682, 0.0
      %v1691 = vmax.f32 %v1683, 0.0
      %v1692 = vmax.f32 %v1684, 0.0
      %v1693 = vmax.f32 %v1685, 0.0
      %v1694 = vmax.f32 %v1686, 0.0
      %v1696 = vlaneseq
      %v1697 = vshrl.u32 %v1696, 7
      %v1698 = vsub.s32 0, %v1697
      %v1699 = vrot.slane %v1672, %v1698
      %v1702 = vsel %vm715, %v1687, 0
      %v1705 = vsel %vm715, %v1688, 0
      %v1708 = vsel %vm715, %v1689, 0
      %v1711 = vsel %vm715, %v1690, 0
      %v1714 = vsel %vm715, %v1691, 0
      %v1717 = vsel %vm715, %v1692, 0
      %v1720 = vsel %vm715, %v1693, 0
      %v1723 = vsel %vm715, %v1694, 0
      %v1726 = vsel %vm1002, %v1671, 0
      %1728 = vmatprep.subr.mxu0 0.0
      %1729 = vmatpush1.msra.mxu0 0.0
      %1730 = vmatprep.subr.mxu0 0.0
      %1731 = vmatpush1.msra.mxu0 0.0
      %1732 = vmatprep.subr.mxu0 0.0
      %1733 = vmatpush1.msra.mxu0 0.0
      %1734 = vmatprep.subr.mxu0 0.0
      %1735 = vmatpush1.msra.mxu0 0.0
      %1736 = vmatprep.subr.mxu0 0.0
      %1737 = vmatpush1.msra.mxu0 0.0
      %1738 = vmatprep.subr.mxu0 0.0
      %1739 = vmatpush1.msra.mxu0 0.0
      %1740 = vmatprep.subr.mxu0 0.0
      %1741 = vmatpush1.msra.mxu0 0.0
      %1742 = vmatprep.subr.mxu0 0.0
      %1743 = vmatpush1.msra.mxu0 0.0
      %1744 = vmatprep.subr.mxu0 0.0
      %1745 = vmatpush1.msra.mxu0 0.0
      %1746 = vmatprep.subr.mxu0 0.0
      %1747 = vmatpush1.msra.mxu0 0.0
      %1748 = vmatprep.subr.mxu0 0.0
      %1749 = vmatpush1.msra.mxu0 0.0
      %1750 = vmatprep.subr.mxu0 0.0
      %1751 = vmatpush1.msra.mxu0 0.0
      %1752 = vmatprep.subr.mxu0 0.0
      %1753 = vmatpush1.msra.mxu0 0.0
      %1754 = vmatprep.subr.mxu0 0.0
      %1755 = vmatpush1.msra.mxu0 0.0
      %1756 = vmatprep.subr.mxu0 0.0
      %1757 = vmatpush1.msra.mxu0 0.0
      %1758 = vmatprep.subr.mxu0 0.0
      %1759 = vmatpush1.msra.mxu0 %v1726
      %1760 = vmatprep.subr.mxu0 0.0
      %1761 = vmatpush2.msra.mxu0 0.0
      %1762 = vmatprep.subr.mxu0 0.0
      %1763 = vmatpush2.msra.mxu0 0.0
      %1764 = vmatprep.subr.mxu0 0.0
      %1765 = vmatpush2.msra.mxu0 0.0
      %1766 = vmatprep.subr.mxu0 0.0
      %1767 = vmatpush2.msra.mxu0 0.0
      %1768 = vmatprep.subr.mxu0 0.0
      %1769 = vmatpush2.msra.mxu0 0.0
      %1770 = vmatprep.subr.mxu0 0.0
      %1771 = vmatpush2.msra.mxu0 0.0
      %1772 = vmatprep.subr.mxu0 0.0
      %1773 = vmatpush2.msra.mxu0 0.0
      %1774 = vmatprep.subr.mxu0 0.0
      %1775 = vmatpush2.msra.mxu0 0.0
      %1776 = vmatprep.subr.mxu0 0.0
      %1777 = vmatpush2.msra.mxu0 0.0
      %1778 = vmatprep.subr.mxu0 0.0
      %1779 = vmatpush2.msra.mxu0 0.0
      %1780 = vmatprep.subr.mxu0 0.0
      %1781 = vmatpush2.msra.mxu0 0.0
      %1782 = vmatprep.subr.mxu0 0.0
      %1783 = vmatpush2.msra.mxu0 0.0
      %1784 = vmatprep.subr.mxu0 0.0
      %1785 = vmatpush2.msra.mxu0 0.0
      %1786 = vmatprep.subr.mxu0 0.0
      %1787 = vmatpush2.msra.mxu0 0.0
      %1788 = vmatprep.subr.mxu0 0.0
      %1789 = vmatpush2.msra.mxu0 0.0
      %1790 = vmatprep.subr.mxu0 0.0
      %1791 = vmatpush2.msra.mxu0 0.0
      %1792 = vmatprep.mubr.f32.mxu0 0.0
      %1793 = vmatmul.mubr.f32.gmra.mxu0 %v1702
      %v1794 = vpop.f32.mrf.mxu0
      %v1795 = vadd.f32 %v1699, %v1794
      %v1796 = vpop.f32.mrf.mxu0
      %1797 = vmatprep.mubr.f32.mxu0 0.0
      %1798 = vmatmul.mubr.f32.gmra.mxu0 %v1705
      %v1799 = vpop.f32.mrf.mxu0
      %v1800 = vadd.f32 %v1699, %v1799
      %v1801 = vpop.f32.mrf.mxu0
      %1802 = vmatprep.mubr.f32.mxu0 0.0
      %1803 = vmatmul.mubr.f32.gmra.mxu0 %v1708
      %v1804 = vpop.f32.mrf.mxu0
      %v1805 = vadd.f32 %v1699, %v1804
      %v1806 = vpop.f32.mrf.mxu0
      %1807 = vmatprep.mubr.f32.mxu0 0.0
      %1808 = vmatmul.mubr.f32.gmra.mxu0 %v1711
      %v1809 = vpop.f32.mrf.mxu0
      %v1810 = vadd.f32 %v1699, %v1809
      %v1811 = vpop.f32.mrf.mxu0
      %1812 = vmatprep.mubr.f32.mxu0 0.0
      %1813 = vmatmul.mubr.f32.gmra.mxu0 %v1714
      %v1814 = vpop.f32.mrf.mxu0
      %v1815 = vadd.f32 %v1699, %v1814
      %v1816 = vpop.f32.mrf.mxu0
      %1817 = vmatprep.mubr.f32.mxu0 0.0
      %1818 = vmatmul.mubr.f32.gmra.mxu0 %v1717
      %v1819 = vpop.f32.mrf.mxu0
      %v1820 = vadd.f32 %v1699, %v1819
      %v1821 = vpop.f32.mrf.mxu0
      %1822 = vmatprep.mubr.f32.mxu0 0.0
      %1823 = vmatmul.mubr.f32.gmra.mxu0 %v1720
      %v1824 = vpop.f32.mrf.mxu0
      %v1825 = vadd.f32 %v1699, %v1824
      %v1826 = vpop.f32.mrf.mxu0
      %1827 = vmatprep.mubr.f32.mxu0 0.0
      %1828 = vmatmul.mubr.f32.gmra.mxu0 %v1723
      %v1829 = vpop.f32.mrf.mxu0
      %v1830 = vadd.f32 %v1699, %v1829
      %v1831 = vpop.f32.mrf.mxu0
      %1832 = vdwg.mxu0
      %v1833 = vmax.f32 %v1795, 0.0
      %v1834 = vmax.f32 %v1800, 0.0
      %v1835 = vmax.f32 %v1805, 0.0
      %v1836 = vmax.f32 %v1810, 0.0
      %v1837 = vmax.f32 %v1815, 0.0
      %v1838 = vmax.f32 %v1820, 0.0
      %v1839 = vmax.f32 %v1825, 0.0
      %v1840 = vmax.f32 %v1830, 0.0
      %vm1841 = vcmask 64512
      %1842 = vst.msk [vmem:[%s483] sm:$0xff] %vm1841, %v1833
      %1843 = vst.msk [vmem:[%s483 + $0x8] sm:$0xff] %vm1841, %v1834
      %1844 = vst.msk [vmem:[%s483 + $0x10] sm:$0xff] %vm1841, %v1835
      %1845 = vst.msk [vmem:[%s483 + $0x18] sm:$0xff] %vm1841, %v1836
      %1846 = vst.msk [vmem:[%s483 + $0x20] sm:$0xff] %vm1841, %v1837
      %1847 = vst.msk [vmem:[%s483 + $0x28] sm:$0xff] %vm1841, %v1838
      %1848 = vst.msk [vmem:[%s483 + $0x30] sm:$0xff] %vm1841, %v1839
      %1849 = vst.msk [vmem:[%s483 + $0x38] sm:$0xff] %vm1841, %v1840
      %1850 = vrot.lane.b32.xlu0 %v1677, 4
      %v1851 = vpop.permute.xlu0 %1850
      %v1853 = vadd.f32 %v1542, %v1851
      %v1854 = vadd.f32 %v1543, %v1851
      %v1855 = vadd.f32 %v1544, %v1851
      %v1856 = vadd.f32 %v1545, %v1851
      %v1857 = vadd.f32 %v1546, %v1851
      %v1858 = vadd.f32 %v1547, %v1851
      %v1859 = vadd.f32 %v1548, %v1851
      %v1860 = vadd.f32 %v1549, %v1851
      %v1861 = vmax.f32 %v1853, 0.0
      %v1862 = vmax.f32 %v1854, 0.0
      %v1863 = vmax.f32 %v1855, 0.0
      %v1864 = vmax.f32 %v1856, 0.0
      %v1865 = vmax.f32 %v1857, 0.0
      %v1866 = vmax.f32 %v1858, 0.0
      %v1867 = vmax.f32 %v1859, 0.0
      %v1868 = vmax.f32 %v1860, 0.0
      %1877 = vrot.lane.b32.xlu0 %v1861, 124
      %v1878 = vpop.permute.xlu0 %1877
      %1879 = vrot.lane.b32.xlu0 %v1862, 124
      %v1880 = vpop.permute.xlu0 %1879
      %1881 = vrot.lane.b32.xlu0 %v1863, 124
      %v1882 = vpop.permute.xlu0 %1881
      %1883 = vrot.lane.b32.xlu0 %v1864, 124
      %v1884 = vpop.permute.xlu0 %1883
      %1885 = vrot.lane.b32.xlu0 %v1865, 124
      %v1886 = vpop.permute.xlu0 %1885
      %1887 = vrot.lane.b32.xlu0 %v1866, 124
      %v1888 = vpop.permute.xlu0 %1887
      %1889 = vrot.lane.b32.xlu0 %v1867, 124
      %v1890 = vpop.permute.xlu0 %1889
      %1891 = vrot.lane.b32.xlu0 %v1868, 124
      %v1892 = vpop.permute.xlu0 %1891
      %v1893 = vsel %vm715, %v1878, 0
      %v1895 = vsel %vm715, %v1880, 0
      %v1897 = vsel %vm715, %v1882, 0
      %v1899 = vsel %vm715, %v1884, 0
      %v1901 = vsel %vm715, %v1886, 0
      %v1903 = vsel %vm715, %v1888, 0
      %v1905 = vsel %vm715, %v1890, 0
      %v1907 = vsel %vm715, %v1892, 0
      %1909 = vmatprep.subr.mxu0 0.0
      %1910 = vmatpush1.msra.mxu0 0.0
      %1911 = vmatprep.subr.mxu0 0.0
      %1912 = vmatpush1.msra.mxu0 0.0
      %1913 = vmatprep.subr.mxu0 0.0
      %1914 = vmatpush1.msra.mxu0 0.0
      %1915 = vmatprep.subr.mxu0 0.0
      %1916 = vmatpush1.msra.mxu0 0.0
      %1917 = vmatprep.subr.mxu0 0.0
      %1918 = vmatpush1.msra.mxu0 0.0
      %1919 = vmatprep.subr.mxu0 0.0
      %1920 = vmatpush1.msra.mxu0 0.0
      %1921 = vmatprep.subr.mxu0 0.0
      %1922 = vmatpush1.msra.mxu0 0.0
      %1923 = vmatprep.subr.mxu0 0.0
      %1924 = vmatpush1.msra.mxu0 0.0
      %1925 = vmatprep.subr.mxu0 0.0
      %1926 = vmatpush1.msra.mxu0 0.0
      %1927 = vmatprep.subr.mxu0 0.0
      %1928 = vmatpush1.msra.mxu0 0.0
      %1929 = vmatprep.subr.mxu0 0.0
      %1930 = vmatpush1.msra.mxu0 0.0
      %1931 = vmatprep.subr.mxu0 0.0
      %1932 = vmatpush1.msra.mxu0 0.0
      %1933 = vmatprep.subr.mxu0 0.0
      %1934 = vmatpush1.msra.mxu0 0.0
      %1935 = vmatprep.subr.mxu0 0.0
      %1936 = vmatpush1.msra.mxu0 0.0
      %1937 = vmatprep.subr.mxu0 0.0
      %1938 = vmatpush1.msra.mxu0 0.0
      %1939 = vmatprep.subr.mxu0 0.0
      %1940 = vmatpush1.msra.mxu0 %v1726
      %1941 = vmatprep.subr.mxu0 0.0
      %1942 = vmatpush2.msra.mxu0 0.0
      %1943 = vmatprep.subr.mxu0 0.0
      %1944 = vmatpush2.msra.mxu0 0.0
      %1945 = vmatprep.subr.mxu0 0.0
      %1946 = vmatpush2.msra.mxu0 0.0
      %1947 = vmatprep.subr.mxu0 0.0
      %1948 = vmatpush2.msra.mxu0 0.0
      %1949 = vmatprep.subr.mxu0 0.0
      %1950 = vmatpush2.msra.mxu0 0.0
      %1951 = vmatprep.subr.mxu0 0.0
      %1952 = vmatpush2.msra.mxu0 0.0
      %1953 = vmatprep.subr.mxu0 0.0
      %1954 = vmatpush2.msra.mxu0 0.0
      %1955 = vmatprep.subr.mxu0 0.0
      %1956 = vmatpush2.msra.mxu0 0.0
      %1957 = vmatprep.subr.mxu0 0.0
      %1958 = vmatpush2.msra.mxu0 0.0
      %1959 = vmatprep.subr.mxu0 0.0
      %1960 = vmatpush2.msra.mxu0 0.0
      %1961 = vmatprep.subr.mxu0 0.0
      %1962 = vmatpush2.msra.mxu0 0.0
      %1963 = vmatprep.subr.mxu0 0.0
      %1964 = vmatpush2.msra.mxu0 0.0
      %1965 = vmatprep.subr.mxu0 0.0
      %1966 = vmatpush2.msra.mxu0 0.0
      %1967 = vmatprep.subr.mxu0 0.0
      %1968 = vmatpush2.msra.mxu0 0.0
      %1969 = vmatprep.subr.mxu0 0.0
      %1970 = vmatpush2.msra.mxu0 0.0
      %1971 = vmatprep.subr.mxu0 0.0
      %1972 = vmatpush2.msra.mxu0 0.0
      %1973 = vmatprep.mubr.f32.mxu0 0.0
      %1974 = vmatmul.mubr.f32.gmra.mxu0 %v1893
      %v1975 = vpop.f32.mrf.mxu0
      %v1976 = vadd.f32 %v1699, %v1975
      %v1977 = vpop.f32.mrf.mxu0
      %1978 = vmatprep.mubr.f32.mxu0 0.0
      %1979 = vmatmul.mubr.f32.gmra.mxu0 %v1895
      %v1980 = vpop.f32.mrf.mxu0
      %v1981 = vadd.f32 %v1699, %v1980
      %v1982 = vpop.f32.mrf.mxu0
      %1983 = vmatprep.mubr.f32.mxu0 0.0
      %1984 = vmatmul.mubr.f32.gmra.mxu0 %v1897
      %v1985 = vpop.f32.mrf.mxu0
      %v1986 = vadd.f32 %v1699, %v1985
      %v1987 = vpop.f32.mrf.mxu0
      %1988 = vmatprep.mubr.f32.mxu0 0.0
      %1989 = vmatmul.mubr.f32.gmra.mxu0 %v1899
      %v1990 = vpop.f32.mrf.mxu0
      %v1991 = vadd.f32 %v1699, %v1990
      %v1992 = vpop.f32.mrf.mxu0
      %1993 = vmatprep.mubr.f32.mxu0 0.0
      %1994 = vmatmul.mubr.f32.gmra.mxu0 %v1901
      %v1995 = vpop.f32.mrf.mxu0
      %v1996 = vadd.f32 %v1699, %v1995
      %v1997 = vpop.f32.mrf.mxu0
      %1998 = vmatprep.mubr.f32.mxu0 0.0
      %1999 = vmatmul.mubr.f32.gmra.mxu0 %v1903
      %v2000 = vpop.f32.mrf.mxu0
      %v2001 = vadd.f32 %v1699, %v2000
      %v2002 = vpop.f32.mrf.mxu0
      %2003 = vmatprep.mubr.f32.mxu0 0.0
      %2004 = vmatmul.mubr.f32.gmra.mxu0 %v1905
      %v2005 = vpop.f32.mrf.mxu0
      %v2006 = vadd.f32 %v1699, %v2005
      %v2007 = vpop.f32.mrf.mxu0
      %2008 = vmatprep.mubr.f32.mxu0 0.0
      %2009 = vmatmul.mubr.f32.gmra.mxu0 %v1907
      %v2010 = vpop.f32.mrf.mxu0
      %v2011 = vadd.f32 %v1699, %v2010
      %v2012 = vpop.f32.mrf.mxu0
      %2013 = vdwg.mxu0
      %v2014 = vmax.f32 %v1976, 0.0
      %v2015 = vmax.f32 %v1981, 0.0
      %v2016 = vmax.f32 %v1986, 0.0
      %v2017 = vmax.f32 %v1991, 0.0
      %v2018 = vmax.f32 %v1996, 0.0
      %v2019 = vmax.f32 %v2001, 0.0
      %v2020 = vmax.f32 %v2006, 0.0
      %v2021 = vmax.f32 %v2011, 0.0
      %2030 = vrot.lane.b32.xlu0 %v2014, 8
      %v2031 = vpop.permute.xlu0 %2030
      %2032 = vrot.lane.b32.xlu0 %v2015, 8
      %v2033 = vpop.permute.xlu0 %2032
      %2034 = vrot.lane.b32.xlu0 %v2016, 8
      %v2035 = vpop.permute.xlu0 %2034
      %2036 = vrot.lane.b32.xlu0 %v2017, 8
      %v2037 = vpop.permute.xlu0 %2036
      %2038 = vrot.lane.b32.xlu0 %v2018, 8
      %v2039 = vpop.permute.xlu0 %2038
      %2040 = vrot.lane.b32.xlu0 %v2019, 8
      %v2041 = vpop.permute.xlu0 %2040
      %2042 = vrot.lane.b32.xlu0 %v2020, 8
      %v2043 = vpop.permute.xlu0 %2042
      %2044 = vrot.lane.b32.xlu0 %v2021, 8
      %v2045 = vpop.permute.xlu0 %2044
      %vm2054 = vcmask 130112
      %2055 = vst.msk [vmem:[%s483] sm:$0xff] %vm2054, %v2031
      %2056 = vst.msk [vmem:[%s483 + $0x8] sm:$0xff] %vm2054, %v2033
      %2057 = vst.msk [vmem:[%s483 + $0x10] sm:$0xff] %vm2054, %v2035
      %2058 = vst.msk [vmem:[%s483 + $0x18] sm:$0xff] %vm2054, %v2037
      %2059 = vst.msk [vmem:[%s483 + $0x20] sm:$0xff] %vm2054, %v2039
      %2060 = vst.msk [vmem:[%s483 + $0x28] sm:$0xff] %vm2054, %v2041
      %2061 = vst.msk [vmem:[%s483 + $0x30] sm:$0xff] %vm2054, %v2043
      %2062 = vst.msk [vmem:[%s483 + $0x38] sm:$0xff] %vm2054, %v2045
      %2063 = vrot.lane.b32.xlu0 %v1677, 8
      %v2064 = vpop.permute.xlu0 %2063
      %v2066 = vadd.f32 %v1582, %v2064
      %v2067 = vadd.f32 %v1583, %v2064
      %v2068 = vadd.f32 %v1584, %v2064
      %v2069 = vadd.f32 %v1585, %v2064
      %v2070 = vadd.f32 %v1586, %v2064
      %v2071 = vadd.f32 %v1587, %v2064
      %v2072 = vadd.f32 %v1588, %v2064
      %v2073 = vadd.f32 %v1589, %v2064
      %v2074 = vmax.f32 %v2066, 0.0
      %v2075 = vmax.f32 %v2067, 0.0
      %v2076 = vmax.f32 %v2068, 0.0
      %v2077 = vmax.f32 %v2069, 0.0
      %v2078 = vmax.f32 %v2070, 0.0
      %v2079 = vmax.f32 %v2071, 0.0
      %v2080 = vmax.f32 %v2072, 0.0
      %v2081 = vmax.f32 %v2073, 0.0
      %2090 = vrot.lane.b32.xlu0 %v2074, 120
      %v2091 = vpop.permute.xlu0 %2090
      %2092 = vrot.lane.b32.xlu0 %v2075, 120
      %v2093 = vpop.permute.xlu0 %2092
      %2094 = vrot.lane.b32.xlu0 %v2076, 120
      %v2095 = vpop.permute.xlu0 %2094
      %2096 = vrot.lane.b32.xlu0 %v2077, 120
      %v2097 = vpop.permute.xlu0 %2096
      %2098 = vrot.lane.b32.xlu0 %v2078, 120
      %v2099 = vpop.permute.xlu0 %2098
      %2100 = vrot.lane.b32.xlu0 %v2079, 120
      %v2101 = vpop.permute.xlu0 %2100
      %2102 = vrot.lane.b32.xlu0 %v2080, 120
      %v2103 = vpop.permute.xlu0 %2102
      %2104 = vrot.lane.b32.xlu0 %v2081, 120
      %v2105 = vpop.permute.xlu0 %2104
      %v2106 = vsel %vm715, %v2091, 0
      %v2108 = vsel %vm715, %v2093, 0
      %v2110 = vsel %vm715, %v2095, 0
      %v2112 = vsel %vm715, %v2097, 0
      %v2114 = vsel %vm715, %v2099, 0
      %v2116 = vsel %vm715, %v2101, 0
      %v2118 = vsel %vm715, %v2103, 0
      %v2120 = vsel %vm715, %v2105, 0
      %2122 = vmatprep.subr.mxu0 0.0
      %2123 = vmatpush1.msra.mxu0 0.0
      %2124 = vmatprep.subr.mxu0 0.0
      %2125 = vmatpush1.msra.mxu0 0.0
      %2126 = vmatprep.subr.mxu0 0.0
      %2127 = vmatpush1.msra.mxu0 0.0
      %2128 = vmatprep.subr.mxu0 0.0
      %2129 = vmatpush1.msra.mxu0 0.0
      %2130 = vmatprep.subr.mxu0 0.0
      %2131 = vmatpush1.msra.mxu0 0.0
      %2132 = vmatprep.subr.mxu0 0.0
      %2133 = vmatpush1.msra.mxu0 0.0
      %2134 = vmatprep.subr.mxu0 0.0
      %2135 = vmatpush1.msra.mxu0 0.0
      %2136 = vmatprep.subr.mxu0 0.0
      %2137 = vmatpush1.msra.mxu0 0.0
      %2138 = vmatprep.subr.mxu0 0.0
      %2139 = vmatpush1.msra.mxu0 0.0
      %2140 = vmatprep.subr.mxu0 0.0
      %2141 = vmatpush1.msra.mxu0 0.0
      %2142 = vmatprep.subr.mxu0 0.0
      %2143 = vmatpush1.msra.mxu0 0.0
      %2144 = vmatprep.subr.mxu0 0.0
      %2145 = vmatpush1.msra.mxu0 0.0
      %2146 = vmatprep.subr.mxu0 0.0
      %2147 = vmatpush1.msra.mxu0 0.0
      %2148 = vmatprep.subr.mxu0 0.0
      %2149 = vmatpush1.msra.mxu0 0.0
      %2150 = vmatprep.subr.mxu0 0.0
      %2151 = vmatpush1.msra.mxu0 0.0
      %2152 = vmatprep.subr.mxu0 0.0
      %2153 = vmatpush1.msra.mxu0 %v1726
      %2154 = vmatprep.subr.mxu0 0.0
      %2155 = vmatpush2.msra.mxu0 0.0
      %2156 = vmatprep.subr.mxu0 0.0
      %2157 = vmatpush2.msra.mxu0 0.0
      %2158 = vmatprep.subr.mxu0 0.0
      %2159 = vmatpush2.msra.mxu0 0.0
      %2160 = vmatprep.subr.mxu0 0.0
      %2161 = vmatpush2.msra.mxu0 0.0
      %2162 = vmatprep.subr.mxu0 0.0
      %2163 = vmatpush2.msra.mxu0 0.0
      %2164 = vmatprep.subr.mxu0 0.0
      %2165 = vmatpush2.msra.mxu0 0.0
      %2166 = vmatprep.subr.mxu0 0.0
      %2167 = vmatpush2.msra.mxu0 0.0
      %2168 = vmatprep.subr.mxu0 0.0
      %2169 = vmatpush2.msra.mxu0 0.0
      %2170 = vmatprep.subr.mxu0 0.0
      %2171 = vmatpush2.msra.mxu0 0.0
      %2172 = vmatprep.subr.mxu0 0.0
      %2173 = vmatpush2.msra.mxu0 0.0
      %2174 = vmatprep.subr.mxu0 0.0
      %2175 = vmatpush2.msra.mxu0 0.0
      %2176 = vmatprep.subr.mxu0 0.0
      %2177 = vmatpush2.msra.mxu0 0.0
      %2178 = vmatprep.subr.mxu0 0.0
      %2179 = vmatpush2.msra.mxu0 0.0
      %2180 = vmatprep.subr.mxu0 0.0
      %2181 = vmatpush2.msra.mxu0 0.0
      %2182 = vmatprep.subr.mxu0 0.0
      %2183 = vmatpush2.msra.mxu0 0.0
      %2184 = vmatprep.subr.mxu0 0.0
      %2185 = vmatpush2.msra.mxu0 0.0
      %2186 = vmatprep.mubr.f32.mxu0 0.0
      %2187 = vmatmul.mubr.f32.gmra.mxu0 %v2106
      %v2188 = vpop.f32.mrf.mxu0
      %v2189 = vadd.f32 %v1699, %v2188
      %v2190 = vpop.f32.mrf.mxu0
      %2191 = vmatprep.mubr.f32.mxu0 0.0
      %2192 = vmatmul.mubr.f32.gmra.mxu0 %v2108
      %v2193 = vpop.f32.mrf.mxu0
      %v2194 = vadd.f32 %v1699, %v2193
      %v2195 = vpop.f32.mrf.mxu0
      %2196 = vmatprep.mubr.f32.mxu0 0.0
      %2197 = vmatmul.mubr.f32.gmra.mxu0 %v2110
      %v2198 = vpop.f32.mrf.mxu0
      %v2199 = vadd.f32 %v1699, %v2198
      %v2200 = vpop.f32.mrf.mxu0
      %2201 = vmatprep.mubr.f32.mxu0 0.0
      %2202 = vmatmul.mubr.f32.gmra.mxu0 %v2112
      %v2203 = vpop.f32.mrf.mxu0
      %v2204 = vadd.f32 %v1699, %v2203
      %v2205 = vpop.f32.mrf.mxu0
      %2206 = vmatprep.mubr.f32.mxu0 0.0
      %2207 = vmatmul.mubr.f32.gmra.mxu0 %v2114
      %v2208 = vpop.f32.mrf.mxu0
      %v2209 = vadd.f32 %v1699, %v2208
      %v2210 = vpop.f32.mrf.mxu0
      %2211 = vmatprep.mubr.f32.mxu0 0.0
      %2212 = vmatmul.mubr.f32.gmra.mxu0 %v2116
      %v2213 = vpop.f32.mrf.mxu0
      %v2214 = vadd.f32 %v1699, %v2213
      %v2215 = vpop.f32.mrf.mxu0
      %2216 = vmatprep.mubr.f32.mxu0 0.0
      %2217 = vmatmul.mubr.f32.gmra.mxu0 %v2118
      %v2218 = vpop.f32.mrf.mxu0
      %v2219 = vadd.f32 %v1699, %v2218
      %v2220 = vpop.f32.mrf.mxu0
      %2221 = vmatprep.mubr.f32.mxu0 0.0
      %2222 = vmatmul.mubr.f32.gmra.mxu0 %v2120
      %v2223 = vpop.f32.mrf.mxu0
      %v2224 = vadd.f32 %v1699, %v2223
      %v2225 = vpop.f32.mrf.mxu0
      %2226 = vdwg.mxu0
      %v2227 = vmax.f32 %v2189, 0.0
      %v2228 = vmax.f32 %v2194, 0.0
      %v2229 = vmax.f32 %v2199, 0.0
      %v2230 = vmax.f32 %v2204, 0.0
      %v2231 = vmax.f32 %v2209, 0.0
      %v2232 = vmax.f32 %v2214, 0.0
      %v2233 = vmax.f32 %v2219, 0.0
      %v2234 = vmax.f32 %v2224, 0.0
      %2243 = vrot.lane.b32.xlu0 %v2227, 16
      %v2244 = vpop.permute.xlu0 %2243
      %2245 = vrot.lane.b32.xlu0 %v2228, 16
      %v2246 = vpop.permute.xlu0 %2245
      %2247 = vrot.lane.b32.xlu0 %v2229, 16
      %v2248 = vpop.permute.xlu0 %2247
      %2249 = vrot.lane.b32.xlu0 %v2230, 16
      %v2250 = vpop.permute.xlu0 %2249
      %2251 = vrot.lane.b32.xlu0 %v2231, 16
      %v2252 = vpop.permute.xlu0 %2251
      %2253 = vrot.lane.b32.xlu0 %v2232, 16
      %v2254 = vpop.permute.xlu0 %2253
      %2255 = vrot.lane.b32.xlu0 %v2233, 16
      %v2256 = vpop.permute.xlu0 %2255
      %2257 = vrot.lane.b32.xlu0 %v2234, 16
      %v2258 = vpop.permute.xlu0 %2257
      %vm2267 = vcmask 195712
      %2268 = vst.msk [vmem:[%s483] sm:$0xff] %vm2267, %v2244
      %2269 = vst.msk [vmem:[%s483 + $0x8] sm:$0xff] %vm2267, %v2246
      %2270 = vst.msk [vmem:[%s483 + $0x10] sm:$0xff] %vm2267, %v2248
      %2271 = vst.msk [vmem:[%s483 + $0x18] sm:$0xff] %vm2267, %v2250
      %2272 = vst.msk [vmem:[%s483 + $0x20] sm:$0xff] %vm2267, %v2252
      %2273 = vst.msk [vmem:[%s483 + $0x28] sm:$0xff] %vm2267, %v2254
      %2274 = vst.msk [vmem:[%s483 + $0x30] sm:$0xff] %vm2267, %v2256
      %2275 = vst.msk [vmem:[%s483 + $0x38] sm:$0xff] %vm2267, %v2258
      %2276 = vrot.lane.b32.xlu0 %v1677, 12
      %v2277 = vpop.permute.xlu0 %2276
      %v2279 = vadd.f32 %v1662, %v2277
      %v2280 = vadd.f32 %v1663, %v2277
      %v2281 = vadd.f32 %v1664, %v2277
      %v2282 = vadd.f32 %v1665, %v2277
      %v2283 = vadd.f32 %v1666, %v2277
      %v2284 = vadd.f32 %v1667, %v2277
      %v2285 = vadd.f32 %v1668, %v2277
      %v2286 = vadd.f32 %v1669, %v2277
      %v2287 = vmax.f32 %v2279, 0.0
      %v2288 = vmax.f32 %v2280, 0.0
      %v2289 = vmax.f32 %v2281, 0.0
      %v2290 = vmax.f32 %v2282, 0.0
      %v2291 = vmax.f32 %v2283, 0.0
      %v2292 = vmax.f32 %v2284, 0.0
      %v2293 = vmax.f32 %v2285, 0.0
      %v2294 = vmax.f32 %v2286, 0.0
      %2303 = vrot.lane.b32.xlu0 %v2287, 116
      %v2304 = vpop.permute.xlu0 %2303
      %2305 = vrot.lane.b32.xlu0 %v2288, 116
      %v2306 = vpop.permute.xlu0 %2305
      %2307 = vrot.lane.b32.xlu0 %v2289, 116
      %v2308 = vpop.permute.xlu0 %2307
      %2309 = vrot.lane.b32.xlu0 %v2290, 116
      %v2310 = vpop.permute.xlu0 %2309
      %2311 = vrot.lane.b32.xlu0 %v2291, 116
      %v2312 = vpop.permute.xlu0 %2311
      %2313 = vrot.lane.b32.xlu0 %v2292, 116
      %v2314 = vpop.permute.xlu0 %2313
      %2315 = vrot.lane.b32.xlu0 %v2293, 116
      %v2316 = vpop.permute.xlu0 %2315
      %2317 = vrot.lane.b32.xlu0 %v2294, 116
      %v2318 = vpop.permute.xlu0 %2317
      %v2319 = vsel %vm715, %v2304, 0
      %v2321 = vsel %vm715, %v2306, 0
      %v2323 = vsel %vm715, %v2308, 0
      %v2325 = vsel %vm715, %v2310, 0
      %v2327 = vsel %vm715, %v2312, 0
      %v2329 = vsel %vm715, %v2314, 0
      %v2331 = vsel %vm715, %v2316, 0
      %v2333 = vsel %vm715, %v2318, 0
      %2335 = vmatprep.subr.mxu0 0.0
      %2336 = vmatpush1.msra.mxu0 0.0
      %2337 = vmatprep.subr.mxu0 0.0
      %2338 = vmatpush1.msra.mxu0 0.0
      %2339 = vmatprep.subr.mxu0 0.0
      %2340 = vmatpush1.msra.mxu0 0.0
      %2341 = vmatprep.subr.mxu0 0.0
      %2342 = vmatpush1.msra.mxu0 0.0
      %2343 = vmatprep.subr.mxu0 0.0
      %2344 = vmatpush1.msra.mxu0 0.0
      %2345 = vmatprep.subr.mxu0 0.0
      %2346 = vmatpush1.msra.mxu0 0.0
      %2347 = vmatprep.subr.mxu0 0.0
      %2348 = vmatpush1.msra.mxu0 0.0
      %2349 = vmatprep.subr.mxu0 0.0
      %2350 = vmatpush1.msra.mxu0 0.0
      %2351 = vmatprep.subr.mxu0 0.0
      %2352 = vmatpush1.msra.mxu0 0.0
      %2353 = vmatprep.subr.mxu0 0.0
      %2354 = vmatpush1.msra.mxu0 0.0
      %2355 = vmatprep.subr.mxu0 0.0
      %2356 = vmatpush1.msra.mxu0 0.0
      %2357 = vmatprep.subr.mxu0 0.0
      %2358 = vmatpush1.msra.mxu0 0.0
      %2359 = vmatprep.subr.mxu0 0.0
      %2360 = vmatpush1.msra.mxu0 0.0
      %2361 = vmatprep.subr.mxu0 0.0
      %2362 = vmatpush1.msra.mxu0 0.0
      %2363 = vmatprep.subr.mxu0 0.0
      %2364 = vmatpush1.msra.mxu0 0.0
      %2365 = vmatprep.subr.mxu0 0.0
      %2366 = vmatpush1.msra.mxu0 %v1726
      %2367 = vmatprep.subr.mxu0 0.0
      %2368 = vmatpush2.msra.mxu0 0.0
      %2369 = vmatprep.subr.mxu0 0.0
      %2370 = vmatpush2.msra.mxu0 0.0
      %2371 = vmatprep.subr.mxu0 0.0
      %2372 = vmatpush2.msra.mxu0 0.0
      %2373 = vmatprep.subr.mxu0 0.0
      %2374 = vmatpush2.msra.mxu0 0.0
      %2375 = vmatprep.subr.mxu0 0.0
      %2376 = vmatpush2.msra.mxu0 0.0
      %2377 = vmatprep.subr.mxu0 0.0
      %2378 = vmatpush2.msra.mxu0 0.0
      %2379 = vmatprep.subr.mxu0 0.0
      %2380 = vmatpush2.msra.mxu0 0.0
      %2381 = vmatprep.subr.mxu0 0.0
      %2382 = vmatpush2.msra.mxu0 0.0
      %2383 = vmatprep.subr.mxu0 0.0
      %2384 = vmatpush2.msra.mxu0 0.0
      %2385 = vmatprep.subr.mxu0 0.0
      %2386 = vmatpush2.msra.mxu0 0.0
      %2387 = vmatprep.subr.mxu0 0.0
      %2388 = vmatpush2.msra.mxu0 0.0
      %2389 = vmatprep.subr.mxu0 0.0
      %2390 = vmatpush2.msra.mxu0 0.0
      %2391 = vmatprep.subr.mxu0 0.0
      %2392 = vmatpush2.msra.mxu0 0.0
      %2393 = vmatprep.subr.mxu0 0.0
      %2394 = vmatpush2.msra.mxu0 0.0
      %2395 = vmatprep.subr.mxu0 0.0
      %2396 = vmatpush2.msra.mxu0 0.0
      %2397 = vmatprep.subr.mxu0 0.0
      %2398 = vmatpush2.msra.mxu0 0.0
      %2399 = vmatprep.mubr.f32.mxu0 0.0
      %2400 = vmatmul.mubr.f32.gmra.mxu0 %v2319
      %v2401 = vpop.f32.mrf.mxu0
      %v2402 = vadd.f32 %v1699, %v2401
      %v2403 = vpop.f32.mrf.mxu0
      %2404 = vmatprep.mubr.f32.mxu0 0.0
      %2405 = vmatmul.mubr.f32.gmra.mxu0 %v2321
      %v2406 = vpop.f32.mrf.mxu0
      %v2407 = vadd.f32 %v1699, %v2406
      %v2408 = vpop.f32.mrf.mxu0
      %2409 = vmatprep.mubr.f32.mxu0 0.0
      %2410 = vmatmul.mubr.f32.gmra.mxu0 %v2323
      %v2411 = vpop.f32.mrf.mxu0
      %v2412 = vadd.f32 %v1699, %v2411
      %v2413 = vpop.f32.mrf.mxu0
      %2414 = vmatprep.mubr.f32.mxu0 0.0
      %2415 = vmatmul.mubr.f32.gmra.mxu0 %v2325
      %v2416 = vpop.f32.mrf.mxu0
      %v2417 = vadd.f32 %v1699, %v2416
      %v2418 = vpop.f32.mrf.mxu0
      %2419 = vmatprep.mubr.f32.mxu0 0.0
      %2420 = vmatmul.mubr.f32.gmra.mxu0 %v2327
      %v2421 = vpop.f32.mrf.mxu0
      %v2422 = vadd.f32 %v1699, %v2421
      %v2423 = vpop.f32.mrf.mxu0
      %2424 = vmatprep.mubr.f32.mxu0 0.0
      %2425 = vmatmul.mubr.f32.gmra.mxu0 %v2329
      %v2426 = vpop.f32.mrf.mxu0
      %v2427 = vadd.f32 %v1699, %v2426
      %v2428 = vpop.f32.mrf.mxu0
      %2429 = vmatprep.mubr.f32.mxu0 0.0
      %2430 = vmatmul.mubr.f32.gmra.mxu0 %v2331
      %v2431 = vpop.f32.mrf.mxu0
      %v2432 = vadd.f32 %v1699, %v2431
      %v2433 = vpop.f32.mrf.mxu0
      %2434 = vmatprep.mubr.f32.mxu0 0.0
      %2435 = vmatmul.mubr.f32.gmra.mxu0 %v2333
      %v2436 = vpop.f32.mrf.mxu0
      %v2437 = vadd.f32 %v1699, %v2436
      %v2438 = vpop.f32.mrf.mxu0
      %2439 = vdwg.mxu0
      %v2440 = vmax.f32 %v2402, 0.0
      %v2441 = vmax.f32 %v2407, 0.0
      %v2442 = vmax.f32 %v2412, 0.0
      %v2443 = vmax.f32 %v2417, 0.0
      %v2444 = vmax.f32 %v2422, 0.0
      %v2445 = vmax.f32 %v2427, 0.0
      %v2446 = vmax.f32 %v2432, 0.0
      %v2447 = vmax.f32 %v2437, 0.0
      %2456 = vrot.lane.b32.xlu0 %v2440, 24
      %v2457 = vpop.permute.xlu0 %2456
      %2458 = vrot.lane.b32.xlu0 %v2441, 24
      %v2459 = vpop.permute.xlu0 %2458
      %2460 = vrot.lane.b32.xlu0 %v2442, 24
      %v2461 = vpop.permute.xlu0 %2460
      %2462 = vrot.lane.b32.xlu0 %v2443, 24
      %v2463 = vpop.permute.xlu0 %2462
      %2464 = vrot.lane.b32.xlu0 %v2444, 24
      %v2465 = vpop.permute.xlu0 %2464
      %2466 = vrot.lane.b32.xlu0 %v2445, 24
      %v2467 = vpop.permute.xlu0 %2466
      %2468 = vrot.lane.b32.xlu0 %v2446, 24
      %v2469 = vpop.permute.xlu0 %2468
      %2470 = vrot.lane.b32.xlu0 %v2447, 24
      %v2471 = vpop.permute.xlu0 %2470
      %vm2480 = vcmask 261312
      %2481 = vst.msk [vmem:[%s483] sm:$0xff] %vm2480, %v2457
      %2482 = vst.msk [vmem:[%s483 + $0x8] sm:$0xff] %vm2480, %v2459
      %2483 = vst.msk [vmem:[%s483 + $0x10] sm:$0xff] %vm2480, %v2461
      %2484 = vst.msk [vmem:[%s483 + $0x18] sm:$0xff] %vm2480, %v2463
      %2485 = vst.msk [vmem:[%s483 + $0x20] sm:$0xff] %vm2480, %v2465
      %2486 = vst.msk [vmem:[%s483 + $0x28] sm:$0xff] %vm2480, %v2467
      %2487 = vst.msk [vmem:[%s483 + $0x30] sm:$0xff] %vm2480, %v2469
      %2488 = vst.msk [vmem:[%s483 + $0x38] sm:$0xff] %vm2480, %v2471
      %s2489 = smul.u32 8, %s27
      %p2490 = scmp.lt.s32.totalorder %s26, 1
      %s2491 = scalar_select %p2490, %s26, 1
      %p2492 = scmp.lt.s32.totalorder %s2489, 7
      %s2493 = scalar_select %p2492, %s2489, 7
      %s2494 = smul.addr %s2491, 8
      %s2495 = sadd.s32 %s2493, %s2494
      %s2496 = smul.addr %s2495, 8
      %s2497 = scalar_lea.vmem %s11, %s2496
      // Predicated region
      $region65: #{tpu_custom_call.1} parent=63 // pred_check
        %p2498 = pneg %p307
      $region66: #{tpu_custom_call.1} parent=63 // pred_check_branch
        %2500 = sbr.rel (%p2498) target = $region68
      $region67: #{tpu_custom_call.1} parent=63 // pred_region
        %s2501 = smul.u32 8, %s27
      $region68: #{tpu_custom_call.1} parent=63 // pred_fallthru
        _
    $region64: #{tpu_custom_call.1} parent=5 // pred_fallthru
      _
    %p2502 = scmp.le.s32.totalorder 2, %s17
    // Predicated region
    $region69: #{tpu_custom_call.1} parent=5 // pred_check
      %p2503 = pneg %p2502
    $region70: #{tpu_custom_call.1} parent=5 // pred_check_branch
      %2505 = sbr.rel (%p2503) target = $region72
    $region71: #{tpu_custom_call.1} parent=5 // pred_region
      %s2506 = ssub.s32 %s17, 2
      // Predicated region
      $region73: #{tpu_custom_call.1} parent=71 // pred_check
        %p2507 = pneg %p313
      $region74: #{tpu_custom_call.1} parent=71 // pred_check_branch
        %2509 = sbr.rel (%p2507) target = $region76
      $region75: #{tpu_custom_call.1} parent=71 // pred_region
        %s2510 = smul.u32 8, %s29
        %p2511 = scmp.lt.s32.totalorder %s28, 1
        %s2512 = scalar_select %p2511, %s28, 1
        %p2513 = scmp.lt.s32.totalorder %s2510, 7
        %s2514 = scalar_select %p2513, %s2510, 7
        %s2515 = smul.addr %s2512, 8
        %s2516 = sadd.s32 %s2514, %s2515
        %s2517 = smul.addr %s2516, 8
        %s2518 = scalar_lea.vmem %s11, %s2517
      $region76: #{tpu_custom_call.1} parent=71 // pred_fallthru
        _
    $region72: #{tpu_custom_call.1} parent=5 // pred_fallthru
      _
  $region6: #{tpu_custom_call.1} parent=0 // loop_footer
    %s21 = sadd.s32 1, %s17
  $region7: #{tpu_custom_call.1} parent=0 // loop_footer_branch
    %16 = sbr.rel target = $region3
  $region8: #{tpu_custom_call.1} parent=0 // loop_exit
    _

</llo_original>
